<compile_context>
chip_gen: v7x
topology: tpu7x:2x2x1
jax: 0.10.0
libtpu: 0.0.40
codegen_flags: <defaults>
</compile_context>

<pallas_src>
import functools
import math

import jax
import jax.numpy as jnp
from jax.experimental import pallas as pl
from jax.experimental.pallas import tpu as pltpu

LN_EPS = 1e-5


def _layernorm(x, gamma, beta):
    mu = jnp.mean(x, axis=-1, keepdims=True)
    var = jnp.mean(jnp.square(x - mu), axis=-1, keepdims=True)
    return (x - mu) * jax.lax.rsqrt(var + LN_EPS) * gamma + beta


# ---------------- fused per-layer Pallas kernel (one (batch, layer) step per grid point) ----------------

def transformer_layer_kernel(x_ref,
                             ln1_g_ref, ln1_b_ref, wqkv_ref, wo_ref, bo_ref,
                             ln2_g_ref, ln2_b_ref, w1_ref, b1_ref, w2_ref, b2_ref,
                             o_ref, *, heads, dim_head, compute_dtype):
    l = pl.program_id(1)                                    # layer index (grid axis 1, "arbitrary")
    inner = heads * dim_head
    scale = dim_head ** (-0.5)
    exact = (compute_dtype == jnp.float32)

    # Residual stream lives in the VMEM-resident output block across the depth axis.
    @pl.when(l == 0)
    def _():
        o_ref[0] = x_ref[0]

    x = o_ref[0]                                            # (N, D) float32

    def cast(a):
        return a.astype(compute_dtype)

    def softmax(s):
        s = s - jnp.max(s, axis=-1, keepdims=True)
        p = jnp.exp(s)
        den = jnp.sum(p, axis=-1, keepdims=True)
        return p / den if exact else p * pl.reciprocal(den, approx=True)

    # ---------------- Residual(PreNorm(Attention)) ----------------
    # TODO(synk): attention mask path (mask is not None) not implemented; forward matches mask=None.
    xn = _layernorm(x, ln1_g_ref[0], ln1_b_ref[0])          # (N, D) f32
    # Single lane-dense QKV projection in the natural (D, 3*inner) layout (weights pre-cast).
    qkv = jnp.dot(cast(xn), wqkv_ref[0],
                  preferred_element_type=jnp.float32)       # (N, 3*inner) f32

    ctx_heads = []
    for h in range(heads):                                  # heads sliced from the lane axis
        q_h = cast(qkv[:, h * dim_head:(h + 1) * dim_head])                      # (N, Dh)
        k_h = cast(qkv[:, inner + h * dim_head:inner + (h + 1) * dim_head])      # (N, Dh)
        v_h = cast(qkv[:, 2 * inner + h * dim_head:2 * inner + (h + 1) * dim_head])
        # q @ k^T via rhs-contracted dot_general (no explicit transpose).
        s = jax.lax.dot_general(q_h, k_h, (((1,), (1,)), ((), ())),
                                preferred_element_type=jnp.float32) * scale      # (N, N) f32
        p = softmax(s)
        ctx_heads.append(jnp.dot(cast(p), v_h,
                                 preferred_element_type=jnp.float32))            # (N, Dh) f32
    ctx = jnp.concatenate(ctx_heads, axis=-1)               # (N, inner) f32

    # Output projection in natural (inner, D) layout; head reduction fused into the K=inner contraction.
    y = jnp.dot(cast(ctx), wo_ref[0],
                preferred_element_type=jnp.float32) + bo_ref[0]
    x = x + y                                               # residual add (f32)

    # ---------------- Residual(PreNorm(FeedForward)) ----------------
    xn = _layernorm(x, ln2_g_ref[0], ln2_b_ref[0])          # (N, D) f32
    h1 = jnp.dot(cast(xn), w1_ref[0],
                 preferred_element_type=jnp.float32) + b1_ref[0]
    # exact (erf-based) GELU matching torch.nn.GELU default — kept f32 (works on v5e VPU too)
    h1 = 0.5 * h1 * (1.0 + jax.lax.erf(h1 * (1.0 / math.sqrt(2.0))))
    y = jnp.dot(cast(h1), w2_ref[0],
                preferred_element_type=jnp.float32) + b2_ref[0]

    o_ref[0] = (x + y).astype(o_ref.dtype)                  # residual add; stays VMEM-resident


# ---------------- wrapper ----------------

def transformer_forward(x, layer_params, heads, dim_head, compute_dtype=jnp.bfloat16):
    """Fused forward; grid = (batch, depth) with per-layer weight blocks."""
    B, N, D = x.shape
    depth = len(layer_params)

    # Natural weight layouts (no per-head re-pack).  Matmul weights pre-cast to compute_dtype;
    # LayerNorm params and biases stay f32 (added to f32 accumulators).
    ln1_g = jnp.stack([p["ln1_g"] for p in layer_params])                        # (L, 1, D)
    ln1_b = jnp.stack([p["ln1_b"] for p in layer_params])                        # (L, 1, D)
    wqkv = jnp.stack([p["wqkv"] for p in layer_params]).astype(compute_dtype)    # (L, D, 3*inner)
    wo = jnp.stack([p["wo"] for p in layer_params]).astype(compute_dtype)        # (L, inner, D)
    bo = jnp.stack([p["bo"] for p in layer_params])                              # (L, 1, D)
    ln2_g = jnp.stack([p["ln2_g"] for p in layer_params])                        # (L, 1, D)
    ln2_b = jnp.stack([p["ln2_b"] for p in layer_params])                        # (L, 1, D)
    w1 = jnp.stack([p["w1"] for p in layer_params]).astype(compute_dtype)        # (L, D, mlp)
    b1 = jnp.stack([p["b1"] for p in layer_params])                              # (L, 1, mlp)
    w2 = jnp.stack([p["w2"] for p in layer_params]).astype(compute_dtype)        # (L, mlp, D)
    b2 = jnp.stack([p["b2"] for p in layer_params])                              # (L, 1, D)
    weights = (ln1_g, ln1_b, wqkv, wo, bo, ln2_g, ln2_b, w1, b1, w2, b2)

    def layer_spec(a):
        # One layer's block per grid step along the depth axis; layer l+1 is prefetched
        # (default double-buffering) while layer l computes.  Only ~2 layers of weights
        # are VMEM-live at any time.
        return pl.BlockSpec((1,) + a.shape[1:],
                            lambda b, l, n=a.ndim: (l,) + (0,) * (n - 1))

    kernel = functools.partial(transformer_layer_kernel, heads=heads,
                               dim_head=dim_head, compute_dtype=compute_dtype)

    return pl.pallas_call(
        kernel,
        out_shape=jax.ShapeDtypeStruct((B, N, D), x.dtype),
        grid=(B, depth),                                    # batch parallel (megacore), depth arbitrary
        in_specs=[pl.BlockSpec((1, N, D), lambda b, l: (b, 0, 0))] +
                 [layer_spec(a) for a in weights],
        out_specs=pl.BlockSpec((1, N, D), lambda b, l: (b, 0, 0)),   # constant across l -> residual accumulator
        compiler_params=pltpu.CompilerParams(
            dimension_semantics=("parallel", "arbitrary"),
            vmem_limit_bytes=32 * 1024 * 1024),
    )(x, *weights)


# ---------------- pure-JAX reference (for verification) ----------------

def ref_forward(x, layer_params, heads, dim_head):
    inner = heads * dim_head
    scale = dim_head ** (-0.5)
    for p in layer_params:
        xn = _layernorm(x, p["ln1_g"], p["ln1_b"])
        qkv = xn @ p["wqkv"]
        q, k, v = jnp.split(qkv, 3, axis=-1)
        B, N, _ = x.shape

        def split_heads(t):
            return jnp.transpose(t.reshape(B, N, heads, dim_head), (0, 2, 1, 3))

        q, k, v = map(split_heads, (q, k, v))
        dots = jnp.einsum("bhid,bhjd->bhij", q, k) * scale
        attn = jax.nn.softmax(dots, axis=-1)
        out = jnp.einsum("bhij,bhjd->bhid", attn, v)
        out = jnp.transpose(out, (0, 2, 1, 3)).reshape(B, N, inner)
        x = out @ p["wo"] + p["bo"] + x
        xn = _layernorm(x, p["ln2_g"], p["ln2_b"])
        h = xn @ p["w1"] + p["b1"]
        h = 0.5 * h * (1.0 + jax.lax.erf(h * (1.0 / math.sqrt(2.0))))
        x = h @ p["w2"] + p["b2"] + x
    return x


# ---------------- parameter init ----------------

def init_params(key, depth, dim, heads, dim_head, mlp_dim):
    inner = heads * dim_head
    layers = []
    for _ in range(depth):
        keys = jax.random.split(key, 8)
        key = keys[0]
        p = {
            "ln1_g": (1.0 + 0.1 * jax.random.normal(keys[1], (1, dim))).astype(jnp.float32),
            "ln1_b": (0.1 * jax.random.normal(keys[2], (1, dim))).astype(jnp.float32),
            "wqkv": (0.05 * jax.random.normal(keys[3], (dim, 3 * inner))).astype(jnp.float32),
            "wo": (0.05 * jax.random.normal(keys[4], (inner, dim))).astype(jnp.float32),
            "bo": (0.05 * jax.random.normal(keys[5], (1, dim))).astype(jnp.float32),
            "ln2_g": (1.0 + 0.1 * jax.random.normal(keys[6], (1, dim))).astype(jnp.float32),
            "ln2_b": (0.1 * jax.random.normal(keys[7], (1, dim))).astype(jnp.float32),
        }
        keys2 = jax.random.split(key, 5)
        key = keys2[0]
        p["w1"] = (0.05 * jax.random.normal(keys2[1], (dim, mlp_dim))).astype(jnp.float32)
        p["b1"] = (0.05 * jax.random.normal(keys2[2], (1, mlp_dim))).astype(jnp.float32)
        p["w2"] = (0.05 * jax.random.normal(keys2[3], (mlp_dim, dim))).astype(jnp.float32)
        p["b2"] = (0.05 * jax.random.normal(keys2[4], (1, dim))).astype(jnp.float32)
        layers.append(p)
    return layers


if __name__ == "__main__":
    # Transformer(dim=32, depth=2, heads=4, dim_head=8, mlp_dim=64, dropout=0.0)
    B, N, D = 2, 8, 32
    depth, heads, dim_head, mlp_dim = 2, 4, 8, 64

    key = jax.random.PRNGKey(0)
    kx, kp = jax.random.split(key)
    x = jax.random.normal(kx, (B, N, D), dtype=jnp.float32)
    params = init_params(kp, depth, D, heads, dim_head, mlp_dim)

    ref = jax.block_until_ready(ref_forward(x, params, heads, dim_head))

    # f32 matmul operands: exact path (exact softmax divide).
    out_f32 = jax.block_until_ready(
        transformer_forward(x, params, heads, dim_head, compute_dtype=jnp.float32))
    assert out_f32.shape == (B, N, D)
    assert jnp.allclose(out_f32, ref, atol=1e-3, rtol=1e-3), "f32 kernel mismatch vs reference"

    # bf16 matmul operands (MXU fast path), f32 accumulation: looser tolerance.
    out_bf16 = jax.block_until_ready(
        transformer_forward(x, params, heads, dim_head, compute_dtype=jnp.bfloat16))
    assert out_bf16.shape == (B, N, D)
    assert jnp.allclose(out_bf16, ref, atol=3e-2, rtol=3e-2), "bf16 kernel mismatch vs reference"

    print("KERNEL_OK")
</pallas_src>

<mosaic_0001>
module attributes {stable_mosaic.version = 11 : i64} {
  func.func @transformer_layer_kernel(%arg0: i32, %arg1: i32, %arg2: memref<1x8x32xf32, #tpu.memory_space<vmem>>, %arg3: memref<1x1x32xf32, #tpu.memory_space<vmem>>, %arg4: memref<1x1x32xf32, #tpu.memory_space<vmem>>, %arg5: memref<1x32x96xf32, #tpu.memory_space<vmem>>, %arg6: memref<1x32x32xf32, #tpu.memory_space<vmem>>, %arg7: memref<1x1x32xf32, #tpu.memory_space<vmem>>, %arg8: memref<1x1x32xf32, #tpu.memory_space<vmem>>, %arg9: memref<1x1x32xf32, #tpu.memory_space<vmem>>, %arg10: memref<1x32x64xf32, #tpu.memory_space<vmem>>, %arg11: memref<1x1x64xf32, #tpu.memory_space<vmem>>, %arg12: memref<1x64x32xf32, #tpu.memory_space<vmem>>, %arg13: memref<1x1x32xf32, #tpu.memory_space<vmem>>, %arg14: memref<1x8x32xf32, #tpu.memory_space<vmem>>) attributes {dimension_semantics = [#tpu.dimension_semantics<parallel>, #tpu.dimension_semantics<arbitrary>], iteration_bounds = array<i64: 2, 2>, scalar_prefetch = 0 : i64, scratch_operands = 0 : i64, tpu.core_type = #tpu.core_type<tc>, window_params = [{transform_indices = @transform_0, window_bounds = array<i64: 1, 8, 32>}, {transform_indices = @transform_1, window_bounds = array<i64: 1, 1, 32>}, {transform_indices = @transform_2, window_bounds = array<i64: 1, 1, 32>}, {transform_indices = @transform_3, window_bounds = array<i64: 1, 32, 96>}, {transform_indices = @transform_4, window_bounds = array<i64: 1, 32, 32>}, {transform_indices = @transform_5, window_bounds = array<i64: 1, 1, 32>}, {transform_indices = @transform_6, window_bounds = array<i64: 1, 1, 32>}, {transform_indices = @transform_7, window_bounds = array<i64: 1, 1, 32>}, {transform_indices = @transform_8, window_bounds = array<i64: 1, 32, 64>}, {transform_indices = @transform_9, window_bounds = array<i64: 1, 1, 64>}, {transform_indices = @transform_10, window_bounds = array<i64: 1, 64, 32>}, {transform_indices = @transform_11, window_bounds = array<i64: 1, 1, 32>}, {transform_indices = @transform_12, window_bounds = array<i64: 1, 8, 32>}]} {
    %c0_i32 = arith.constant 0 : i32
    %0 = arith.cmpi eq, %arg1, %c0_i32 : i32
    %1 = arith.extui %0 : i1 to i32
    %c0_i32_0 = arith.constant 0 : i32
    %2 = arith.cmpi ne, %1, %c0_i32_0 : i32
    scf.if %2 {
      %c0_75 = arith.constant 0 : index
      %c0_76 = arith.constant 0 : index
      %c0_77 = arith.constant 0 : index
      %159 = vector.load %arg2[%c0_75, %c0_76, %c0_77] : memref<1x8x32xf32, #tpu.memory_space<vmem>>, vector<1x8x32xf32>
      %160 = vector.shape_cast %159 : vector<1x8x32xf32> to vector<8x32xf32>
      %c0_78 = arith.constant 0 : index
      %c0_79 = arith.constant 0 : index
      %c0_80 = arith.constant 0 : index
      %161 = vector.load %arg14[%c0_78, %c0_79, %c0_80] : memref<1x8x32xf32, #tpu.memory_space<vmem>>, vector<1x8x32xf32>
      %162 = vector.shape_cast %161 : vector<1x8x32xf32> to vector<8x32xf32>
      %163 = vector.shape_cast %160 : vector<8x32xf32> to vector<1x8x32xf32>
      tpu.vector_store %arg14[%c0_78, %c0_79, %c0_80], %163 {strides = array<i32>} : memref<1x8x32xf32, #tpu.memory_space<vmem>>, vector<1x8x32xf32>,
    } else {
    }
    %c0 = arith.constant 0 : index
    %c0_1 = arith.constant 0 : index
    %c0_2 = arith.constant 0 : index
    %3 = vector.load %arg14[%c0, %c0_1, %c0_2] : memref<1x8x32xf32, #tpu.memory_space<vmem>>, vector<1x8x32xf32>
    %4 = vector.shape_cast %3 : vector<1x8x32xf32> to vector<8x32xf32>
    %c0_3 = arith.constant 0 : index
    %c0_4 = arith.constant 0 : index
    %c0_5 = arith.constant 0 : index
    %5 = vector.load %arg3[%c0_3, %c0_4, %c0_5] : memref<1x1x32xf32, #tpu.memory_space<vmem>>, vector<1x1x32xf32>
    %6 = vector.shape_cast %5 : vector<1x1x32xf32> to vector<1x32xf32>
    %c0_6 = arith.constant 0 : index
    %c0_7 = arith.constant 0 : index
    %c0_8 = arith.constant 0 : index
    %7 = vector.load %arg4[%c0_6, %c0_7, %c0_8] : memref<1x1x32xf32, #tpu.memory_space<vmem>>, vector<1x1x32xf32>
    %8 = vector.shape_cast %7 : vector<1x1x32xf32> to vector<1x32xf32>
    %cst = arith.constant dense<0.000000e+00> : vector<8xf32>
    %9 = vector.multi_reduction <add>, %4, %cst [1] : vector<8x32xf32> to vector<8xf32>
    %10 = vector.shape_cast %9 : vector<8xf32> to vector<8x1xf32>
    %cst_9 = arith.constant 3.200000e+01 : f32
    %11 = vector.broadcast %cst_9 : f32 to vector<8x1xf32>
    %12 = arith.divf %10, %11 : vector<8x1xf32>
    %13 = vector.broadcast %12 : vector<8x1xf32> to vector<8x32xf32>
    %14 = arith.subf %4, %13 : vector<8x32xf32>
    %15 = arith.mulf %14, %14 : vector<8x32xf32>
    %cst_10 = arith.constant dense<0.000000e+00> : vector<8xf32>
    %16 = vector.multi_reduction <add>, %15, %cst_10 [1] : vector<8x32xf32> to vector<8xf32>
    %17 = vector.shape_cast %16 : vector<8xf32> to vector<8x1xf32>
    %cst_11 = arith.constant 3.200000e+01 : f32
    %18 = vector.broadcast %cst_11 : f32 to vector<8x1xf32>
    %19 = arith.divf %17, %18 : vector<8x1xf32>
    %20 = vector.broadcast %12 : vector<8x1xf32> to vector<8x32xf32>
    %21 = arith.subf %4, %20 : vector<8x32xf32>
    %cst_12 = arith.constant 9.99999974E-6 : f32
    %22 = vector.broadcast %cst_12 : f32 to vector<8x1xf32>
    %23 = arith.addf %19, %22 : vector<8x1xf32>
    %24 = math.rsqrt %23 : vector<8x1xf32>
    %25 = vector.broadcast %24 : vector<8x1xf32> to vector<8x32xf32>
    %26 = arith.mulf %21, %25 : vector<8x32xf32>
    %27 = vector.broadcast %6 : vector<1x32xf32> to vector<8x32xf32>
    %28 = arith.mulf %26, %27 : vector<8x32xf32>
    %29 = vector.broadcast %8 : vector<1x32xf32> to vector<8x32xf32>
    %30 = arith.addf %28, %29 : vector<8x32xf32>
    %c0_13 = arith.constant 0 : index
    %c0_14 = arith.constant 0 : index
    %c0_15 = arith.constant 0 : index
    %31 = vector.load %arg5[%c0_13, %c0_14, %c0_15] : memref<1x32x96xf32, #tpu.memory_space<vmem>>, vector<1x32x96xf32>
    %32 = vector.shape_cast %31 : vector<1x32x96xf32> to vector<32x96xf32>
    %cst_16 = arith.constant dense<0.000000e+00> : vector<8x96xf32>
    %33 = tpu.matmul %30, %32, %cst_16 {dimension_numbers = #tpu.dot_dimension_numbers<[1], [0], [0], [1], [0, 0, 1, 1], [], []>} : vector<8x32xf32>, vector<32x96xf32>, vector<8x96xf32> -> vector<8x96xf32>
    %34 = vector.extract_strided_slice %33 {offsets = [0, 0], sizes = [8, 8], strides = [1, 1]} : vector<8x96xf32> to vector<8x8xf32>
    %35 = vector.extract_strided_slice %33 {offsets = [0, 32], sizes = [8, 8], strides = [1, 1]} : vector<8x96xf32> to vector<8x8xf32>
    %36 = vector.extract_strided_slice %33 {offsets = [0, 64], sizes = [8, 8], strides = [1, 1]} : vector<8x96xf32> to vector<8x8xf32>
    %cst_17 = arith.constant dense<0.000000e+00> : vector<8x8xf32>
    %37 = tpu.matmul %34, %35, %cst_17 {dimension_numbers = #tpu.dot_dimension_numbers<[1], [1], [0], [0], [0, 0, 1, 0], [], []>} : vector<8x8xf32>, vector<8x8xf32>, vector<8x8xf32> -> vector<8x8xf32>
    %cst_18 = arith.constant 0.353553385 : f32
    %38 = vector.broadcast %cst_18 : f32 to vector<8x8xf32>
    %39 = arith.mulf %37, %38 : vector<8x8xf32>
    %cst_19 = arith.constant dense<0xFF800000> : vector<8xf32>
    %40 = vector.multi_reduction <maximumf>, %39, %cst_19 [1] : vector<8x8xf32> to vector<8xf32>
    %41 = vector.shape_cast %40 : vector<8xf32> to vector<8x1xf32>
    %42 = vector.broadcast %41 : vector<8x1xf32> to vector<8x8xf32>
    %43 = arith.subf %39, %42 : vector<8x8xf32>
    %44 = math.exp %43 : vector<8x8xf32>
    %cst_20 = arith.constant dense<0.000000e+00> : vector<8xf32>
    %45 = vector.multi_reduction <add>, %44, %cst_20 [1] : vector<8x8xf32> to vector<8xf32>
    %46 = vector.shape_cast %45 : vector<8xf32> to vector<8x1xf32>
    %47 = vector.broadcast %46 : vector<8x1xf32> to vector<8x8xf32>
    %48 = arith.divf %44, %47 : vector<8x8xf32>
    %cst_21 = arith.constant dense<0.000000e+00> : vector<8x8xf32>
    %49 = tpu.matmul %48, %36, %cst_21 {dimension_numbers = #tpu.dot_dimension_numbers<[1], [0], [0], [1], [0, 0, 1, 1], [], []>} : vector<8x8xf32>, vector<8x8xf32>, vector<8x8xf32> -> vector<8x8xf32>
    %50 = vector.extract_strided_slice %33 {offsets = [0, 8], sizes = [8, 8], strides = [1, 1]} : vector<8x96xf32> to vector<8x8xf32>
    %51 = vector.extract_strided_slice %33 {offsets = [0, 40], sizes = [8, 8], strides = [1, 1]} : vector<8x96xf32> to vector<8x8xf32>
    %52 = vector.extract_strided_slice %33 {offsets = [0, 72], sizes = [8, 8], strides = [1, 1]} : vector<8x96xf32> to vector<8x8xf32>
    %cst_22 = arith.constant dense<0.000000e+00> : vector<8x8xf32>
    %53 = tpu.matmul %50, %51, %cst_22 {dimension_numbers = #tpu.dot_dimension_numbers<[1], [1], [0], [0], [0, 0, 1, 0], [], []>} : vector<8x8xf32>, vector<8x8xf32>, vector<8x8xf32> -> vector<8x8xf32>
    %cst_23 = arith.constant 0.353553385 : f32
    %54 = vector.broadcast %cst_23 : f32 to vector<8x8xf32>
    %55 = arith.mulf %53, %54 : vector<8x8xf32>
    %cst_24 = arith.constant dense<0xFF800000> : vector<8xf32>
    %56 = vector.multi_reduction <maximumf>, %55, %cst_24 [1] : vector<8x8xf32> to vector<8xf32>
    %57 = vector.shape_cast %56 : vector<8xf32> to vector<8x1xf32>
    %58 = vector.broadcast %57 : vector<8x1xf32> to vector<8x8xf32>
    %59 = arith.subf %55, %58 : vector<8x8xf32>
    %60 = math.exp %59 : vector<8x8xf32>
    %cst_25 = arith.constant dense<0.000000e+00> : vector<8xf32>
    %61 = vector.multi_reduction <add>, %60, %cst_25 [1] : vector<8x8xf32> to vector<8xf32>
    %62 = vector.shape_cast %61 : vector<8xf32> to vector<8x1xf32>
    %63 = vector.broadcast %62 : vector<8x1xf32> to vector<8x8xf32>
    %64 = arith.divf %60, %63 : vector<8x8xf32>
    %cst_26 = arith.constant dense<0.000000e+00> : vector<8x8xf32>
    %65 = tpu.matmul %64, %52, %cst_26 {dimension_numbers = #tpu.dot_dimension_numbers<[1], [0], [0], [1], [0, 0, 1, 1], [], []>} : vector<8x8xf32>, vector<8x8xf32>, vector<8x8xf32> -> vector<8x8xf32>
    %66 = vector.extract_strided_slice %33 {offsets = [0, 16], sizes = [8, 8], strides = [1, 1]} : vector<8x96xf32> to vector<8x8xf32>
    %67 = vector.extract_strided_slice %33 {offsets = [0, 48], sizes = [8, 8], strides = [1, 1]} : vector<8x96xf32> to vector<8x8xf32>
    %68 = vector.extract_strided_slice %33 {offsets = [0, 80], sizes = [8, 8], strides = [1, 1]} : vector<8x96xf32> to vector<8x8xf32>
    %cst_27 = arith.constant dense<0.000000e+00> : vector<8x8xf32>
    %69 = tpu.matmul %66, %67, %cst_27 {dimension_numbers = #tpu.dot_dimension_numbers<[1], [1], [0], [0], [0, 0, 1, 0], [], []>} : vector<8x8xf32>, vector<8x8xf32>, vector<8x8xf32> -> vector<8x8xf32>
    %cst_28 = arith.constant 0.353553385 : f32
    %70 = vector.broadcast %cst_28 : f32 to vector<8x8xf32>
    %71 = arith.mulf %69, %70 : vector<8x8xf32>
    %cst_29 = arith.constant dense<0xFF800000> : vector<8xf32>
    %72 = vector.multi_reduction <maximumf>, %71, %cst_29 [1] : vector<8x8xf32> to vector<8xf32>
    %73 = vector.shape_cast %72 : vector<8xf32> to vector<8x1xf32>
    %74 = vector.broadcast %73 : vector<8x1xf32> to vector<8x8xf32>
    %75 = arith.subf %71, %74 : vector<8x8xf32>
    %76 = math.exp %75 : vector<8x8xf32>
    %cst_30 = arith.constant dense<0.000000e+00> : vector<8xf32>
    %77 = vector.multi_reduction <add>, %76, %cst_30 [1] : vector<8x8xf32> to vector<8xf32>
    %78 = vector.shape_cast %77 : vector<8xf32> to vector<8x1xf32>
    %79 = vector.broadcast %78 : vector<8x1xf32> to vector<8x8xf32>
    %80 = arith.divf %76, %79 : vector<8x8xf32>
    %cst_31 = arith.constant dense<0.000000e+00> : vector<8x8xf32>
    %81 = tpu.matmul %80, %68, %cst_31 {dimension_numbers = #tpu.dot_dimension_numbers<[1], [0], [0], [1], [0, 0, 1, 1], [], []>} : vector<8x8xf32>, vector<8x8xf32>, vector<8x8xf32> -> vector<8x8xf32>
    %82 = vector.extract_strided_slice %33 {offsets = [0, 24], sizes = [8, 8], strides = [1, 1]} : vector<8x96xf32> to vector<8x8xf32>
    %83 = vector.extract_strided_slice %33 {offsets = [0, 56], sizes = [8, 8], strides = [1, 1]} : vector<8x96xf32> to vector<8x8xf32>
    %84 = vector.extract_strided_slice %33 {offsets = [0, 88], sizes = [8, 8], strides = [1, 1]} : vector<8x96xf32> to vector<8x8xf32>
    %cst_32 = arith.constant dense<0.000000e+00> : vector<8x8xf32>
    %85 = tpu.matmul %82, %83, %cst_32 {dimension_numbers = #tpu.dot_dimension_numbers<[1], [1], [0], [0], [0, 0, 1, 0], [], []>} : vector<8x8xf32>, vector<8x8xf32>, vector<8x8xf32> -> vector<8x8xf32>
    %cst_33 = arith.constant 0.353553385 : f32
    %86 = vector.broadcast %cst_33 : f32 to vector<8x8xf32>
    %87 = arith.mulf %85, %86 : vector<8x8xf32>
    %cst_34 = arith.constant dense<0xFF800000> : vector<8xf32>
    %88 = vector.multi_reduction <maximumf>, %87, %cst_34 [1] : vector<8x8xf32> to vector<8xf32>
    %89 = vector.shape_cast %88 : vector<8xf32> to vector<8x1xf32>
    %90 = vector.broadcast %89 : vector<8x1xf32> to vector<8x8xf32>
    %91 = arith.subf %87, %90 : vector<8x8xf32>
    %92 = math.exp %91 : vector<8x8xf32>
    %cst_35 = arith.constant dense<0.000000e+00> : vector<8xf32>
    %93 = vector.multi_reduction <add>, %92, %cst_35 [1] : vector<8x8xf32> to vector<8xf32>
    %94 = vector.shape_cast %93 : vector<8xf32> to vector<8x1xf32>
    %95 = vector.broadcast %94 : vector<8x1xf32> to vector<8x8xf32>
    %96 = arith.divf %92, %95 : vector<8x8xf32>
    %cst_36 = arith.constant dense<0.000000e+00> : vector<8x8xf32>
    %97 = tpu.matmul %96, %84, %cst_36 {dimension_numbers = #tpu.dot_dimension_numbers<[1], [0], [0], [1], [0, 0, 1, 1], [], []>} : vector<8x8xf32>, vector<8x8xf32>, vector<8x8xf32> -> vector<8x8xf32>
    %98 = tpu.concatenate %49, %65, %81, %97 in 1 : vector<8x8xf32>, vector<8x8xf32>, vector<8x8xf32>, vector<8x8xf32> -> vector<8x32xf32>
    %c0_37 = arith.constant 0 : index
    %c0_38 = arith.constant 0 : index
    %c0_39 = arith.constant 0 : index
    %99 = vector.load %arg6[%c0_37, %c0_38, %c0_39] : memref<1x32x32xf32, #tpu.memory_space<vmem>>, vector<1x32x32xf32>
    %100 = vector.shape_cast %99 : vector<1x32x32xf32> to vector<32x32xf32>
    %cst_40 = arith.constant dense<0.000000e+00> : vector<8x32xf32>
    %101 = tpu.matmul %98, %100, %cst_40 {dimension_numbers = #tpu.dot_dimension_numbers<[1], [0], [0], [1], [0, 0, 1, 1], [], []>} : vector<8x32xf32>, vector<32x32xf32>, vector<8x32xf32> -> vector<8x32xf32>
    %c0_41 = arith.constant 0 : index
    %c0_42 = arith.constant 0 : index
    %c0_43 = arith.constant 0 : index
    %102 = vector.load %arg7[%c0_41, %c0_42, %c0_43] : memref<1x1x32xf32, #tpu.memory_space<vmem>>, vector<1x1x32xf32>
    %103 = vector.shape_cast %102 : vector<1x1x32xf32> to vector<1x32xf32>
    %104 = vector.broadcast %103 : vector<1x32xf32> to vector<8x32xf32>
    %105 = arith.addf %101, %104 : vector<8x32xf32>
    %106 = arith.addf %4, %105 : vector<8x32xf32>
    %c0_44 = arith.constant 0 : index
    %c0_45 = arith.constant 0 : index
    %c0_46 = arith.constant 0 : index
    %107 = vector.load %arg8[%c0_44, %c0_45, %c0_46] : memref<1x1x32xf32, #tpu.memory_space<vmem>>, vector<1x1x32xf32>
    %108 = vector.shape_cast %107 : vector<1x1x32xf32> to vector<1x32xf32>
    %c0_47 = arith.constant 0 : index
    %c0_48 = arith.constant 0 : index
    %c0_49 = arith.constant 0 : index
    %109 = vector.load %arg9[%c0_47, %c0_48, %c0_49] : memref<1x1x32xf32, #tpu.memory_space<vmem>>, vector<1x1x32xf32>
    %110 = vector.shape_cast %109 : vector<1x1x32xf32> to vector<1x32xf32>
    %cst_50 = arith.constant dense<0.000000e+00> : vector<8xf32>
    %111 = vector.multi_reduction <add>, %106, %cst_50 [1] : vector<8x32xf32> to vector<8xf32>
    %112 = vector.shape_cast %111 : vector<8xf32> to vector<8x1xf32>
    %cst_51 = arith.constant 3.200000e+01 : f32
    %113 = vector.broadcast %cst_51 : f32 to vector<8x1xf32>
    %114 = arith.divf %112, %113 : vector<8x1xf32>
    %115 = vector.broadcast %114 : vector<8x1xf32> to vector<8x32xf32>
    %116 = arith.subf %106, %115 : vector<8x32xf32>
    %117 = arith.mulf %116, %116 : vector<8x32xf32>
    %cst_52 = arith.constant dense<0.000000e+00> : vector<8xf32>
    %118 = vector.multi_reduction <add>, %117, %cst_52 [1] : vector<8x32xf32> to vector<8xf32>
    %119 = vector.shape_cast %118 : vector<8xf32> to vector<8x1xf32>
    %cst_53 = arith.constant 3.200000e+01 : f32
    %120 = vector.broadcast %cst_53 : f32 to vector<8x1xf32>
    %121 = arith.divf %119, %120 : vector<8x1xf32>
    %122 = vector.broadcast %114 : vector<8x1xf32> to vector<8x32xf32>
    %123 = arith.subf %106, %122 : vector<8x32xf32>
    %cst_54 = arith.constant 9.99999974E-6 : f32
    %124 = vector.broadcast %cst_54 : f32 to vector<8x1xf32>
    %125 = arith.addf %121, %124 : vector<8x1xf32>
    %126 = math.rsqrt %125 : vector<8x1xf32>
    %127 = vector.broadcast %126 : vector<8x1xf32> to vector<8x32xf32>
    %128 = arith.mulf %123, %127 : vector<8x32xf32>
    %129 = vector.broadcast %108 : vector<1x32xf32> to vector<8x32xf32>
    %130 = arith.mulf %128, %129 : vector<8x32xf32>
    %131 = vector.broadcast %110 : vector<1x32xf32> to vector<8x32xf32>
    %132 = arith.addf %130, %131 : vector<8x32xf32>
    %c0_55 = arith.constant 0 : index
    %c0_56 = arith.constant 0 : index
    %c0_57 = arith.constant 0 : index
    %133 = vector.load %arg10[%c0_55, %c0_56, %c0_57] : memref<1x32x64xf32, #tpu.memory_space<vmem>>, vector<1x32x64xf32>
    %134 = vector.shape_cast %133 : vector<1x32x64xf32> to vector<32x64xf32>
    %cst_58 = arith.constant dense<0.000000e+00> : vector<8x64xf32>
    %135 = tpu.matmul %132, %134, %cst_58 {dimension_numbers = #tpu.dot_dimension_numbers<[1], [0], [0], [1], [0, 0, 1, 1], [], []>} : vector<8x32xf32>, vector<32x64xf32>, vector<8x64xf32> -> vector<8x64xf32>
    %c0_59 = arith.constant 0 : index
    %c0_60 = arith.constant 0 : index
    %c0_61 = arith.constant 0 : index
    %136 = vector.load %arg11[%c0_59, %c0_60, %c0_61] : memref<1x1x64xf32, #tpu.memory_space<vmem>>, vector<1x1x64xf32>
    %137 = vector.shape_cast %136 : vector<1x1x64xf32> to vector<1x64xf32>
    %138 = vector.broadcast %137 : vector<1x64xf32> to vector<8x64xf32>
    %139 = arith.addf %135, %138 : vector<8x64xf32>
    %cst_62 = arith.constant 5.000000e-01 : f32
    %140 = vector.broadcast %cst_62 : f32 to vector<8x64xf32>
    %141 = arith.mulf %140, %139 : vector<8x64xf32>
    %cst_63 = arith.constant 0.707106769 : f32
    %142 = vector.broadcast %cst_63 : f32 to vector<8x64xf32>
    %143 = arith.mulf %139, %142 : vector<8x64xf32>
    %144 = math.erf %143 : vector<8x64xf32>
    %cst_64 = arith.constant 1.000000e+00 : f32
    %145 = vector.broadcast %cst_64 : f32 to vector<8x64xf32>
    %146 = arith.addf %145, %144 : vector<8x64xf32>
    %147 = arith.mulf %141, %146 : vector<8x64xf32>
    %c0_65 = arith.constant 0 : index
    %c0_66 = arith.constant 0 : index
    %c0_67 = arith.constant 0 : index
    %148 = vector.load %arg12[%c0_65, %c0_66, %c0_67] : memref<1x64x32xf32, #tpu.memory_space<vmem>>, vector<1x64x32xf32>
    %149 = vector.shape_cast %148 : vector<1x64x32xf32> to vector<64x32xf32>
    %cst_68 = arith.constant dense<0.000000e+00> : vector<8x32xf32>
    %150 = tpu.matmul %147, %149, %cst_68 {dimension_numbers = #tpu.dot_dimension_numbers<[1], [0], [0], [1], [0, 0, 1, 1], [], []>} : vector<8x64xf32>, vector<64x32xf32>, vector<8x32xf32> -> vector<8x32xf32>
    %c0_69 = arith.constant 0 : index
    %c0_70 = arith.constant 0 : index
    %c0_71 = arith.constant 0 : index
    %151 = vector.load %arg13[%c0_69, %c0_70, %c0_71] : memref<1x1x32xf32, #tpu.memory_space<vmem>>, vector<1x1x32xf32>
    %152 = vector.shape_cast %151 : vector<1x1x32xf32> to vector<1x32xf32>
    %153 = vector.broadcast %152 : vector<1x32xf32> to vector<8x32xf32>
    %154 = arith.addf %150, %153 : vector<8x32xf32>
    %155 = arith.addf %106, %154 : vector<8x32xf32>
    %c0_72 = arith.constant 0 : index
    %c0_73 = arith.constant 0 : index
    %c0_74 = arith.constant 0 : index
    %156 = vector.load %arg14[%c0_72, %c0_73, %c0_74] : memref<1x8x32xf32, #tpu.memory_space<vmem>>, vector<1x8x32xf32>
    %157 = vector.shape_cast %156 : vector<1x8x32xf32> to vector<8x32xf32>
    %158 = vector.shape_cast %155 : vector<8x32xf32> to vector<1x8x32xf32>
    tpu.vector_store %arg14[%c0_72, %c0_73, %c0_74], %158 {strides = array<i32>} : memref<1x8x32xf32, #tpu.memory_space<vmem>>, vector<1x8x32xf32>,
    return
  }
  func.func @transform_0(%arg0: i32, %arg1: i32) -> (i32, i32, i32) {
    %c0_i32 = arith.constant 0 : i32
    %c0_i32_0 = arith.constant 0 : i32
    %c0_i32_1 = arith.constant 0 : i32
    return %arg0, %c0_i32, %c0_i32_0 : i32, i32, i32
  }
  func.func @transform_1(%arg0: i32, %arg1: i32) -> (i32, i32, i32) {
    %c0_i32 = arith.constant 0 : i32
    %c0_i32_0 = arith.constant 0 : i32
    %c0_i32_1 = arith.constant 0 : i32
    return %arg1, %c0_i32, %c0_i32_0 : i32, i32, i32
  }
  func.func @transform_2(%arg0: i32, %arg1: i32) -> (i32, i32, i32) {
    %c0_i32 = arith.constant 0 : i32
    %c0_i32_0 = arith.constant 0 : i32
    %c0_i32_1 = arith.constant 0 : i32
    return %arg1, %c0_i32, %c0_i32_0 : i32, i32, i32
  }
  func.func @transform_3(%arg0: i32, %arg1: i32) -> (i32, i32, i32) {
    %c0_i32 = arith.constant 0 : i32
    %c0_i32_0 = arith.constant 0 : i32
    %c0_i32_1 = arith.constant 0 : i32
    return %arg1, %c0_i32, %c0_i32_0 : i32, i32, i32
  }
  func.func @transform_4(%arg0: i32, %arg1: i32) -> (i32, i32, i32) {
    %c0_i32 = arith.constant 0 : i32
    %c0_i32_0 = arith.constant 0 : i32
    %c0_i32_1 = arith.constant 0 : i32
    return %arg1, %c0_i32, %c0_i32_0 : i32, i32, i32
  }
  func.func @transform_5(%arg0: i32, %arg1: i32) -> (i32, i32, i32) {
    %c0_i32 = arith.constant 0 : i32
    %c0_i32_0 = arith.constant 0 : i32
    %c0_i32_1 = arith.constant 0 : i32
    return %arg1, %c0_i32, %c0_i32_0 : i32, i32, i32
  }
  func.func @transform_6(%arg0: i32, %arg1: i32) -> (i32, i32, i32) {
    %c0_i32 = arith.constant 0 : i32
    %c0_i32_0 = arith.constant 0 : i32
    %c0_i32_1 = arith.constant 0 : i32
    return %arg1, %c0_i32, %c0_i32_0 : i32, i32, i32
  }
  func.func @transform_7(%arg0: i32, %arg1: i32) -> (i32, i32, i32) {
    %c0_i32 = arith.constant 0 : i32
    %c0_i32_0 = arith.constant 0 : i32
    %c0_i32_1 = arith.constant 0 : i32
    return %arg1, %c0_i32, %c0_i32_0 : i32, i32, i32
  }
  func.func @transform_8(%arg0: i32, %arg1: i32) -> (i32, i32, i32) {
    %c0_i32 = arith.constant 0 : i32
    %c0_i32_0 = arith.constant 0 : i32
    %c0_i32_1 = arith.constant 0 : i32
    return %arg1, %c0_i32, %c0_i32_0 : i32, i32, i32
  }
  func.func @transform_9(%arg0: i32, %arg1: i32) -> (i32, i32, i32) {
    %c0_i32 = arith.constant 0 : i32
    %c0_i32_0 = arith.constant 0 : i32
    %c0_i32_1 = arith.constant 0 : i32
    return %arg1, %c0_i32, %c0_i32_0 : i32, i32, i32
  }
  func.func @transform_10(%arg0: i32, %arg1: i32) -> (i32, i32, i32) {
    %c0_i32 = arith.constant 0 : i32
    %c0_i32_0 = arith.constant 0 : i32
    %c0_i32_1 = arith.constant 0 : i32
    return %arg1, %c0_i32, %c0_i32_0 : i32, i32, i32
  }
  func.func @transform_11(%arg0: i32, %arg1: i32) -> (i32, i32, i32) {
    %c0_i32 = arith.constant 0 : i32
    %c0_i32_0 = arith.constant 0 : i32
    %c0_i32_1 = arith.constant 0 : i32
    return %arg1, %c0_i32, %c0_i32_0 : i32, i32, i32
  }
  func.func @transform_12(%arg0: i32, %arg1: i32) -> (i32, i32, i32) {
    %c0_i32 = arith.constant 0 : i32
    %c0_i32_0 = arith.constant 0 : i32
    %c0_i32_1 = arith.constant 0 : i32
    return %arg0, %c0_i32, %c0_i32_0 : i32, i32, i32
  }
}

</mosaic_0001>

<llo_original>
// kernel: tpu_custom_call.1
$region0: #{tpu_custom_call.1}
  #allocation0 [shape = 'u32[]', space=smem, size = 0x4, offset = 0x4, fixed_abs, tag = 'smem constant byte address 0x4 - core index']
  #allocation1 [shape = 'u32[144,128]{1,0:T(1,128)}', space=vmem, size = 0x12000, scoped, tag = 'internal scratch']
  %s0 = inlined_call_operand.hbm [shape: f32[2,8,32], index: 0, kind: input, shape index: {}]
  %s1 = inlined_call_operand.vmem [shape: f32[2,1,32], index: 1, kind: input, shape index: {}]
  %s2 = inlined_call_operand.vmem [shape: f32[2,1,32], index: 2, kind: input, shape index: {}]
  %s3 = inlined_call_operand.vmem [shape: f32[2,32,96], index: 3, kind: input, shape index: {}]
  %s4 = inlined_call_operand.vmem [shape: f32[2,32,32], index: 4, kind: input, shape index: {}]
  %s5 = inlined_call_operand.vmem [shape: f32[2,1,32], index: 5, kind: input, shape index: {}]
  %s6 = inlined_call_operand.vmem [shape: f32[2,1,32], index: 6, kind: input, shape index: {}]
  %s7 = inlined_call_operand.vmem [shape: f32[2,1,32], index: 7, kind: input, shape index: {}]
  %s8 = inlined_call_operand.vmem [shape: f32[2,32,64], index: 8, kind: input, shape index: {}]
  %s9 = inlined_call_operand.vmem [shape: f32[2,1,64], index: 9, kind: input, shape index: {}]
  %s10 = inlined_call_operand.vmem [shape: f32[2,64,32], index: 10, kind: input, shape index: {}]
  %s11 = inlined_call_operand.vmem [shape: f32[2,1,32], index: 11, kind: input, shape index: {}]
  %s12 = inlined_call_operand.hbm [shape: f32[2,8,32], index: 12, kind: output, shape index: {}]
  %s13 = sld [smem:[#allocation0]]
  $region89: #{tpu_custom_call.1} parent=0
    _
  %s15 = ssub.s32 1, %s13
  %s16 = scalar_select 0, %s15, %s13
  $region1: #{tpu_custom_call.1} parent=0
    #allocation2 [shape = 'u8[8192]{0}', space=vmem, size = 0x2000, scoped, tag = 'input window, operand 0']
    #allocation3 [shape = 's32[2]{0}', space=sflag, size = 0x8, scoped, tag = 'scoped memory for tpu_custom_call.1']
    #allocation4 [shape = 's32[2]{0}', space=sflag, size = 0x8, scoped, tag = 'scoped memory for tpu_custom_call.1']
    #allocation5 [shape = 'u8[8192]{0}', space=vmem, size = 0x2000, scoped, tag = 'output window, operand 0']
    %17 = vsyncpa [#allocation3], 0
    %s18 = scalar_lea.sflag [#allocation3], 1
    %19 = vsyncpa %s18, 0
    %20 = vsyncpa [#allocation4], 0
    %s21 = scalar_lea.sflag [#allocation4], 1
    %22 = vsyncpa %s21, 0
    loop: start=0, step=1, limit=6
    $region2: #{tpu_custom_call.1} parent=1 // loop_pre_header
      _
    $region3: #{tpu_custom_call.1} parent=1 // loop_header
      %s24 = sphi 0, %s28
      %p25 = scmp.ge.s32.totalorder %s24, 6
      %s31 = sphi 0, %s43
      %s32 = sphi 0, %s39
      %s33 = sphi 0, %s31
      %s34 = sphi 0, %s32
      %s35 = sphi 0, %s33
      %s36 = sphi 0, %s34
      %s46 = sphi 0, %s48
      %s49 = sphi 0, %s46
      %s50 = sphi 0, %s49
      %s66 = sphi 0, %s50
      %s72 = sphi 0, %s74
      %s75 = sphi 0, %s72
      %s76 = sphi 0, %s75
      %s92 = sphi 0, %s76
      %s98 = sphi 0, %s100
      %s101 = sphi 0, %s98
      %s102 = sphi 0, %s101
      %s118 = sphi 0, %s102
      %s124 = sphi 0, %s126
      %s127 = sphi 0, %s124
      %s128 = sphi 0, %s127
      %s144 = sphi 0, %s128
      %s150 = sphi 0, %s152
      %s153 = sphi 0, %s150
      %s154 = sphi 0, %s153
      %s170 = sphi 0, %s154
      %s176 = sphi 0, %s178
      %s179 = sphi 0, %s176
      %s180 = sphi 0, %s179
      %s196 = sphi 0, %s180
      %s202 = sphi 0, %s204
      %s205 = sphi 0, %s202
      %s206 = sphi 0, %s205
      %s222 = sphi 0, %s206
      %s228 = sphi 0, %s230
      %s231 = sphi 0, %s228
      %s232 = sphi 0, %s231
      %s248 = sphi 0, %s232
      %s254 = sphi 0, %s256
      %s257 = sphi 0, %s254
      %s258 = sphi 0, %s257
      %s274 = sphi 0, %s258
      %s280 = sphi 0, %s282
      %s283 = sphi 0, %s280
      %s284 = sphi 0, %s283
      %s300 = sphi 0, %s284
      %s306 = sphi 0, %s308
      %s309 = sphi 0, %s306
      %s310 = sphi 0, %s309
      %s326 = sphi 0, %s310
      %s332 = sphi 0, %s334
      %s335 = sphi 0, %s332
      %s336 = sphi 0, %s335
      %s352 = sphi 0, %s336
      %s358 = sphi 0, %s360
      %s361 = sphi 0, %s358
      %s362 = sphi 0, %s361
      %s378 = sphi 0, %s362
    $region4: #{tpu_custom_call.1} parent=1 // loop_header_branch
      %27 = sbr.rel (%p25) target = $region8
    $region5: #{tpu_custom_call.1} parent=1 // loop_body
      %s29 = ssub.s32 %s24, 1
      %s30 = ssub.s32 %s24, 2
      %s37 = sadd.s32 1, %s32
      %p38 = scmp.ge.s32.totalorder %s37, 2
      %s39 = scalar_select %p38, 0, %s37
      %s40 = sadd.s32 1, %s31
      %s41 = scalar_select %p38, %s40, %s31
      %p42 = scmp.ge.s32.totalorder %s41, 2
      %s43 = scalar_select %p42, 0, %s41
      %s44 = ssub.s32 %s31, %s43
      %p45 = scmp.eq.s32.totalorder %s44, 0
      %s47 = sadd.s32 %s46, 1
      %s48 = scalar_select %p45, %s46, %s47
      %p51 = pneg %p45
      %p52 = scmp.eq.s32.totalorder %s24, 3
      %p53 = por %p51, %p52
      %p54 = scmp.ne.s32.totalorder %s46, %s49
      %p55 = scmp.eq.s32.totalorder %s24, 0
      %p56 = por %p54, %p55
      %p57 = scmp.ne.s32.totalorder %s46, %s49
      %p58 = scmp.eq.s32.totalorder %s29, 3
      %p59 = por %p57, %p58
      %p60 = scmp.ne.s32.totalorder %s49, %s50
      %p61 = scmp.eq.s32.totalorder %s29, 0
      %p62 = por %p60, %p61
      %p63 = scmp.ne.s32.totalorder %s49, %s50
      %p64 = scmp.eq.s32.totalorder %s30, 3
      %p65 = por %p63, %p64
      %p67 = scmp.ne.s32.totalorder %s50, %s66
      %p68 = scmp.eq.s32.totalorder %s30, 0
      %p69 = por %p67, %p68
      %s70 = ssub.s32 %s32, %s39
      %p71 = scmp.eq.s32.totalorder %s70, 0
      %s73 = sadd.s32 %s72, 1
      %s74 = scalar_select %p71, %s72, %s73
      %p77 = pneg %p71
      %p78 = scmp.eq.s32.totalorder %s24, 3
      %p79 = por %p77, %p78
      %p80 = scmp.ne.s32.totalorder %s72, %s75
      %p81 = scmp.eq.s32.totalorder %s24, 0
      %p82 = por %p80, %p81
      %p83 = scmp.ne.s32.totalorder %s72, %s75
      %p84 = scmp.eq.s32.totalorder %s29, 3
      %p85 = por %p83, %p84
      %p86 = scmp.ne.s32.totalorder %s75, %s76
      %p87 = scmp.eq.s32.totalorder %s29, 0
      %p88 = por %p86, %p87
      %p89 = scmp.ne.s32.totalorder %s75, %s76
      %p90 = scmp.eq.s32.totalorder %s30, 3
      %p91 = por %p89, %p90
      %p93 = scmp.ne.s32.totalorder %s76, %s92
      %p94 = scmp.eq.s32.totalorder %s30, 0
      %p95 = por %p93, %p94
      %s96 = ssub.s32 %s32, %s39
      %p97 = scmp.eq.s32.totalorder %s96, 0
      %s99 = sadd.s32 %s98, 1
      %s100 = scalar_select %p97, %s98, %s99
      %p103 = pneg %p97
      %p104 = scmp.eq.s32.totalorder %s24, 3
      %p105 = por %p103, %p104
      %p106 = scmp.ne.s32.totalorder %s98, %s101
      %p107 = scmp.eq.s32.totalorder %s24, 0
      %p108 = por %p106, %p107
      %p109 = scmp.ne.s32.totalorder %s98, %s101
      %p110 = scmp.eq.s32.totalorder %s29, 3
      %p111 = por %p109, %p110
      %p112 = scmp.ne.s32.totalorder %s101, %s102
      %p113 = scmp.eq.s32.totalorder %s29, 0
      %p114 = por %p112, %p113
      %p115 = scmp.ne.s32.totalorder %s101, %s102
      %p116 = scmp.eq.s32.totalorder %s30, 3
      %p117 = por %p115, %p116
      %p119 = scmp.ne.s32.totalorder %s102, %s118
      %p120 = scmp.eq.s32.totalorder %s30, 0
      %p121 = por %p119, %p120
      %s122 = ssub.s32 %s32, %s39
      %p123 = scmp.eq.s32.totalorder %s122, 0
      %s125 = sadd.s32 %s124, 1
      %s126 = scalar_select %p123, %s124, %s125
      %p129 = pneg %p123
      %p130 = scmp.eq.s32.totalorder %s24, 3
      %p131 = por %p129, %p130
      %p132 = scmp.ne.s32.totalorder %s124, %s127
      %p133 = scmp.eq.s32.totalorder %s24, 0
      %p134 = por %p132, %p133
      %p135 = scmp.ne.s32.totalorder %s124, %s127
      %p136 = scmp.eq.s32.totalorder %s29, 3
      %p137 = por %p135, %p136
      %p138 = scmp.ne.s32.totalorder %s127, %s128
      %p139 = scmp.eq.s32.totalorder %s29, 0
      %p140 = por %p138, %p139
      %p141 = scmp.ne.s32.totalorder %s127, %s128
      %p142 = scmp.eq.s32.totalorder %s30, 3
      %p143 = por %p141, %p142
      %p145 = scmp.ne.s32.totalorder %s128, %s144
      %p146 = scmp.eq.s32.totalorder %s30, 0
      %p147 = por %p145, %p146
      %s148 = ssub.s32 %s32, %s39
      %p149 = scmp.eq.s32.totalorder %s148, 0
      %s151 = sadd.s32 %s150, 1
      %s152 = scalar_select %p149, %s150, %s151
      %p155 = pneg %p149
      %p156 = scmp.eq.s32.totalorder %s24, 3
      %p157 = por %p155, %p156
      %p158 = scmp.ne.s32.totalorder %s150, %s153
      %p159 = scmp.eq.s32.totalorder %s24, 0
      %p160 = por %p158, %p159
      %p161 = scmp.ne.s32.totalorder %s150, %s153
      %p162 = scmp.eq.s32.totalorder %s29, 3
      %p163 = por %p161, %p162
      %p164 = scmp.ne.s32.totalorder %s153, %s154
      %p165 = scmp.eq.s32.totalorder %s29, 0
      %p166 = por %p164, %p165
      %p167 = scmp.ne.s32.totalorder %s153, %s154
      %p168 = scmp.eq.s32.totalorder %s30, 3
      %p169 = por %p167, %p168
      %p171 = scmp.ne.s32.totalorder %s154, %s170
      %p172 = scmp.eq.s32.totalorder %s30, 0
      %p173 = por %p171, %p172
      %s174 = ssub.s32 %s32, %s39
      %p175 = scmp.eq.s32.totalorder %s174, 0
      %s177 = sadd.s32 %s176, 1
      %s178 = scalar_select %p175, %s176, %s177
      %p181 = pneg %p175
      %p182 = scmp.eq.s32.totalorder %s24, 3
      %p183 = por %p181, %p182
      %p184 = scmp.ne.s32.totalorder %s176, %s179
      %p185 = scmp.eq.s32.totalorder %s24, 0
      %p186 = por %p184, %p185
      %p187 = scmp.ne.s32.totalorder %s176, %s179
      %p188 = scmp.eq.s32.totalorder %s29, 3
      %p189 = por %p187, %p188
      %p190 = scmp.ne.s32.totalorder %s179, %s180
      %p191 = scmp.eq.s32.totalorder %s29, 0
      %p192 = por %p190, %p191
      %p193 = scmp.ne.s32.totalorder %s179, %s180
      %p194 = scmp.eq.s32.totalorder %s30, 3
      %p195 = por %p193, %p194
      %p197 = scmp.ne.s32.totalorder %s180, %s196
      %p198 = scmp.eq.s32.totalorder %s30, 0
      %p199 = por %p197, %p198
      %s200 = ssub.s32 %s32, %s39
      %p201 = scmp.eq.s32.totalorder %s200, 0
      %s203 = sadd.s32 %s202, 1
      %s204 = scalar_select %p201, %s202, %s203
      %p207 = pneg %p201
      %p208 = scmp.eq.s32.totalorder %s24, 3
      %p209 = por %p207, %p208
      %p210 = scmp.ne.s32.totalorder %s202, %s205
      %p211 = scmp.eq.s32.totalorder %s24, 0
      %p212 = por %p210, %p211
      %p213 = scmp.ne.s32.totalorder %s202, %s205
      %p214 = scmp.eq.s32.totalorder %s29, 3
      %p215 = por %p213, %p214
      %p216 = scmp.ne.s32.totalorder %s205, %s206
      %p217 = scmp.eq.s32.totalorder %s29, 0
      %p218 = por %p216, %p217
      %p219 = scmp.ne.s32.totalorder %s205, %s206
      %p220 = scmp.eq.s32.totalorder %s30, 3
      %p221 = por %p219, %p220
      %p223 = scmp.ne.s32.totalorder %s206, %s222
      %p224 = scmp.eq.s32.totalorder %s30, 0
      %p225 = por %p223, %p224
      %s226 = ssub.s32 %s32, %s39
      %p227 = scmp.eq.s32.totalorder %s226, 0
      %s229 = sadd.s32 %s228, 1
      %s230 = scalar_select %p227, %s228, %s229
      %p233 = pneg %p227
      %p234 = scmp.eq.s32.totalorder %s24, 3
      %p235 = por %p233, %p234
      %p236 = scmp.ne.s32.totalorder %s228, %s231
      %p237 = scmp.eq.s32.totalorder %s24, 0
      %p238 = por %p236, %p237
      %p239 = scmp.ne.s32.totalorder %s228, %s231
      %p240 = scmp.eq.s32.totalorder %s29, 3
      %p241 = por %p239, %p240
      %p242 = scmp.ne.s32.totalorder %s231, %s232
      %p243 = scmp.eq.s32.totalorder %s29, 0
      %p244 = por %p242, %p243
      %p245 = scmp.ne.s32.totalorder %s231, %s232
      %p246 = scmp.eq.s32.totalorder %s30, 3
      %p247 = por %p245, %p246
      %p249 = scmp.ne.s32.totalorder %s232, %s248
      %p250 = scmp.eq.s32.totalorder %s30, 0
      %p251 = por %p249, %p250
      %s252 = ssub.s32 %s32, %s39
      %p253 = scmp.eq.s32.totalorder %s252, 0
      %s255 = sadd.s32 %s254, 1
      %s256 = scalar_select %p253, %s254, %s255
      %p259 = pneg %p253
      %p260 = scmp.eq.s32.totalorder %s24, 3
      %p261 = por %p259, %p260
      %p262 = scmp.ne.s32.totalorder %s254, %s257
      %p263 = scmp.eq.s32.totalorder %s24, 0
      %p264 = por %p262, %p263
      %p265 = scmp.ne.s32.totalorder %s254, %s257
      %p266 = scmp.eq.s32.totalorder %s29, 3
      %p267 = por %p265, %p266
      %p268 = scmp.ne.s32.totalorder %s257, %s258
      %p269 = scmp.eq.s32.totalorder %s29, 0
      %p270 = por %p268, %p269
      %p271 = scmp.ne.s32.totalorder %s257, %s258
      %p272 = scmp.eq.s32.totalorder %s30, 3
      %p273 = por %p271, %p272
      %p275 = scmp.ne.s32.totalorder %s258, %s274
      %p276 = scmp.eq.s32.totalorder %s30, 0
      %p277 = por %p275, %p276
      %s278 = ssub.s32 %s32, %s39
      %p279 = scmp.eq.s32.totalorder %s278, 0
      %s281 = sadd.s32 %s280, 1
      %s282 = scalar_select %p279, %s280, %s281
      %p285 = pneg %p279
      %p286 = scmp.eq.s32.totalorder %s24, 3
      %p287 = por %p285, %p286
      %p288 = scmp.ne.s32.totalorder %s280, %s283
      %p289 = scmp.eq.s32.totalorder %s24, 0
      %p290 = por %p288, %p289
      %p291 = scmp.ne.s32.totalorder %s280, %s283
      %p292 = scmp.eq.s32.totalorder %s29, 3
      %p293 = por %p291, %p292
      %p294 = scmp.ne.s32.totalorder %s283, %s284
      %p295 = scmp.eq.s32.totalorder %s29, 0
      %p296 = por %p294, %p295
      %p297 = scmp.ne.s32.totalorder %s283, %s284
      %p298 = scmp.eq.s32.totalorder %s30, 3
      %p299 = por %p297, %p298
      %p301 = scmp.ne.s32.totalorder %s284, %s300
      %p302 = scmp.eq.s32.totalorder %s30, 0
      %p303 = por %p301, %p302
      %s304 = ssub.s32 %s32, %s39
      %p305 = scmp.eq.s32.totalorder %s304, 0
      %s307 = sadd.s32 %s306, 1
      %s308 = scalar_select %p305, %s306, %s307
      %p311 = pneg %p305
      %p312 = scmp.eq.s32.totalorder %s24, 3
      %p313 = por %p311, %p312
      %p314 = scmp.ne.s32.totalorder %s306, %s309
      %p315 = scmp.eq.s32.totalorder %s24, 0
      %p316 = por %p314, %p315
      %p317 = scmp.ne.s32.totalorder %s306, %s309
      %p318 = scmp.eq.s32.totalorder %s29, 3
      %p319 = por %p317, %p318
      %p320 = scmp.ne.s32.totalorder %s309, %s310
      %p321 = scmp.eq.s32.totalorder %s29, 0
      %p322 = por %p320, %p321
      %p323 = scmp.ne.s32.totalorder %s309, %s310
      %p324 = scmp.eq.s32.totalorder %s30, 3
      %p325 = por %p323, %p324
      %p327 = scmp.ne.s32.totalorder %s310, %s326
      %p328 = scmp.eq.s32.totalorder %s30, 0
      %p329 = por %p327, %p328
      %s330 = ssub.s32 %s32, %s39
      %p331 = scmp.eq.s32.totalorder %s330, 0
      %s333 = sadd.s32 %s332, 1
      %s334 = scalar_select %p331, %s332, %s333
      %p337 = pneg %p331
      %p338 = scmp.eq.s32.totalorder %s24, 3
      %p339 = por %p337, %p338
      %p340 = scmp.ne.s32.totalorder %s332, %s335
      %p341 = scmp.eq.s32.totalorder %s24, 0
      %p342 = por %p340, %p341
      %p343 = scmp.ne.s32.totalorder %s332, %s335
      %p344 = scmp.eq.s32.totalorder %s29, 3
      %p345 = por %p343, %p344
      %p346 = scmp.ne.s32.totalorder %s335, %s336
      %p347 = scmp.eq.s32.totalorder %s29, 0
      %p348 = por %p346, %p347
      %p349 = scmp.ne.s32.totalorder %s335, %s336
      %p350 = scmp.eq.s32.totalorder %s30, 3
      %p351 = por %p349, %p350
      %p353 = scmp.ne.s32.totalorder %s336, %s352
      %p354 = scmp.eq.s32.totalorder %s30, 0
      %p355 = por %p353, %p354
      %s356 = ssub.s32 %s31, %s43
      %p357 = scmp.eq.s32.totalorder %s356, 0
      %s359 = sadd.s32 %s358, 1
      %s360 = scalar_select %p357, %s358, %s359
      %p363 = pneg %p357
      %p364 = scmp.eq.s32.totalorder %s24, 3
      %p365 = por %p363, %p364
      %p366 = scmp.ne.s32.totalorder %s358, %s361
      %p367 = scmp.eq.s32.totalorder %s24, 0
      %p368 = por %p366, %p367
      %p369 = scmp.ne.s32.totalorder %s358, %s361
      %p370 = scmp.eq.s32.totalorder %s29, 3
      %p371 = por %p369, %p370
      %p372 = scmp.ne.s32.totalorder %s361, %s362
      %p373 = scmp.eq.s32.totalorder %s29, 0
      %p374 = por %p372, %p373
      %p375 = scmp.ne.s32.totalorder %s361, %s362
      %p376 = scmp.eq.s32.totalorder %s30, 3
      %p377 = por %p375, %p376
      %p379 = scmp.ne.s32.totalorder %s362, %s378
      %p380 = scmp.eq.s32.totalorder %s30, 0
      %p381 = por %p379, %p380
      %p382 = scmp.le.s32.totalorder 1, %s24
      %p383 = scmp.lt.s32.totalorder %s24, 5
      %p384 = pnand %p382, %p383
      %p385 = pneg %p384
      // Predicated region
      $region9: #{tpu_custom_call.1} parent=5 // pred_check
        _
      $region10: #{tpu_custom_call.1} parent=5 // pred_check_branch
        %387 = sbr.rel (%p384) target = $region12
      $region11: #{tpu_custom_call.1} parent=5 // pred_region
        %s388 = ssub.s32 %s24, 1
      $region12: #{tpu_custom_call.1} parent=5 // pred_fallthru
        _
      %p389 = scmp.lt.s32.totalorder %s24, 4
      // Predicated region
      $region13: #{tpu_custom_call.1} parent=5 // pred_check
        %p390 = pneg %p389
      $region14: #{tpu_custom_call.1} parent=5 // pred_check_branch
        %392 = sbr.rel (%p390) target = $region16
      $region15: #{tpu_custom_call.1} parent=5 // pred_region
        // Predicated region
        $region17: #{tpu_custom_call.1} parent=15 // pred_check
          %p393 = pneg %p56
        $region18: #{tpu_custom_call.1} parent=15 // pred_check_branch
          %395 = sbr.rel (%p393) target = $region20
        $region19: #{tpu_custom_call.1} parent=15 // pred_region
          %s396 = sand.u32 %s46, 1
          %s397 = scalar_lea.sflag [#allocation3], %s396
          %s398 = sand.u32 %s46, 1
          %s399 = smul.addr %s398, 8
          %s400 = scalar_lea.vmem [#allocation2], %s399
          %s402 = ssub.s32 128, 128
          %403 = vsyncadd %s397, %s402
          %s404 = smul.addr %s31, 128
          %s405 = scalar_lea.hbm %s0, %s404
          %s407 = sshll.u32 %s400, 4
          %s408 = int_to_ptr.vmem [resolvable:$true] %s407
          %410 = dma.hbm_to_vmem [thread:$0]  %s405, 128, %s408, %s397
        $region20: #{tpu_custom_call.1} parent=15 // pred_fallthru
          _
        // Predicated region
        $region21: #{tpu_custom_call.1} parent=15 // pred_check
          %p411 = pneg %p82
        $region22: #{tpu_custom_call.1} parent=15 // pred_check_branch
          %413 = sbr.rel (%p411) target = $region24
        $region23: #{tpu_custom_call.1} parent=15 // pred_region
          %p414 = scmp.lt.s32.totalorder %s32, 1
          %s415 = scalar_select %p414, %s32, 1
          %s416 = scalar_lea.vmem %s1, %s415
        $region24: #{tpu_custom_call.1} parent=15 // pred_fallthru
          _
        // Predicated region
        $region25: #{tpu_custom_call.1} parent=15 // pred_check
          %p417 = pneg %p108
        $region26: #{tpu_custom_call.1} parent=15 // pred_check_branch
          %419 = sbr.rel (%p417) target = $region28
        $region27: #{tpu_custom_call.1} parent=15 // pred_region
          %p420 = scmp.lt.s32.totalorder %s32, 1
          %s421 = scalar_select %p420, %s32, 1
          %s422 = scalar_lea.vmem %s2, %s421
        $region28: #{tpu_custom_call.1} parent=15 // pred_fallthru
          _
        // Predicated region
        $region29: #{tpu_custom_call.1} parent=15 // pred_check
          %p423 = pneg %p134
        $region30: #{tpu_custom_call.1} parent=15 // pred_check_branch
          %425 = sbr.rel (%p423) target = $region32
        $region31: #{tpu_custom_call.1} parent=15 // pred_region
          %p426 = scmp.lt.s32.totalorder %s32, 1
          %s427 = scalar_select %p426, %s32, 1
          %s428 = smul.addr %s427, 4
          %s429 = smul.addr %s428, 8
          %s430 = scalar_lea.vmem %s3, %s429
        $region32: #{tpu_custom_call.1} parent=15 // pred_fallthru
          _
        // Predicated region
        $region33: #{tpu_custom_call.1} parent=15 // pred_check
          %p431 = pneg %p160
        $region34: #{tpu_custom_call.1} parent=15 // pred_check_branch
          %433 = sbr.rel (%p431) target = $region36
        $region35: #{tpu_custom_call.1} parent=15 // pred_region
          %p434 = scmp.lt.s32.totalorder %s32, 1
          %s435 = scalar_select %p434, %s32, 1
          %s436 = smul.addr %s435, 4
          %s437 = smul.addr %s436, 8
          %s438 = scalar_lea.vmem %s4, %s437
        $region36: #{tpu_custom_call.1} parent=15 // pred_fallthru
          _
        // Predicated region
        $region37: #{tpu_custom_call.1} parent=15 // pred_check
          %p439 = pneg %p186
        $region38: #{tpu_custom_call.1} parent=15 // pred_check_branch
          %441 = sbr.rel (%p439) target = $region40
        $region39: #{tpu_custom_call.1} parent=15 // pred_region
          %p442 = scmp.lt.s32.totalorder %s32, 1
          %s443 = scalar_select %p442, %s32, 1
          %s444 = scalar_lea.vmem %s5, %s443
        $region40: #{tpu_custom_call.1} parent=15 // pred_fallthru
          _
        // Predicated region
        $region41: #{tpu_custom_call.1} parent=15 // pred_check
          %p445 = pneg %p212
        $region42: #{tpu_custom_call.1} parent=15 // pred_check_branch
          %447 = sbr.rel (%p445) target = $region44
        $region43: #{tpu_custom_call.1} parent=15 // pred_region
          %p448 = scmp.lt.s32.totalorder %s32, 1
          %s449 = scalar_select %p448, %s32, 1
          %s450 = scalar_lea.vmem %s6, %s449
        $region44: #{tpu_custom_call.1} parent=15 // pred_fallthru
          _
        // Predicated region
        $region45: #{tpu_custom_call.1} parent=15 // pred_check
          %p451 = pneg %p238
        $region46: #{tpu_custom_call.1} parent=15 // pred_check_branch
          %453 = sbr.rel (%p451) target = $region48
        $region47: #{tpu_custom_call.1} parent=15 // pred_region
          %p454 = scmp.lt.s32.totalorder %s32, 1
          %s455 = scalar_select %p454, %s32, 1
          %s456 = scalar_lea.vmem %s7, %s455
        $region48: #{tpu_custom_call.1} parent=15 // pred_fallthru
          _
        // Predicated region
        $region49: #{tpu_custom_call.1} parent=15 // pred_check
          %p457 = pneg %p264
        $region50: #{tpu_custom_call.1} parent=15 // pred_check_branch
          %459 = sbr.rel (%p457) target = $region52
        $region51: #{tpu_custom_call.1} parent=15 // pred_region
          %p460 = scmp.lt.s32.totalorder %s32, 1
          %s461 = scalar_select %p460, %s32, 1
          %s462 = smul.addr %s461, 4
          %s463 = smul.addr %s462, 8
          %s464 = scalar_lea.vmem %s8, %s463
        $region52: #{tpu_custom_call.1} parent=15 // pred_fallthru
          _
        // Predicated region
        $region53: #{tpu_custom_call.1} parent=15 // pred_check
          %p465 = pneg %p290
        $region54: #{tpu_custom_call.1} parent=15 // pred_check_branch
          %467 = sbr.rel (%p465) target = $region56
        $region55: #{tpu_custom_call.1} parent=15 // pred_region
          %p468 = scmp.lt.s32.totalorder %s32, 1
          %s469 = scalar_select %p468, %s32, 1
          %s470 = scalar_lea.vmem %s9, %s469
        $region56: #{tpu_custom_call.1} parent=15 // pred_fallthru
          _
        // Predicated region
        $region57: #{tpu_custom_call.1} parent=15 // pred_check
          %p471 = pneg %p316
        $region58: #{tpu_custom_call.1} parent=15 // pred_check_branch
          %473 = sbr.rel (%p471) target = $region60
        $region59: #{tpu_custom_call.1} parent=15 // pred_region
          %p474 = scmp.lt.s32.totalorder %s32, 1
          %s475 = scalar_select %p474, %s32, 1
          %s476 = smul.addr %s475, 8
          %s477 = smul.addr %s476, 8
          %s478 = scalar_lea.vmem %s10, %s477
        $region60: #{tpu_custom_call.1} parent=15 // pred_fallthru
          _
        // Predicated region
        $region61: #{tpu_custom_call.1} parent=15 // pred_check
          %p479 = pneg %p342
        $region62: #{tpu_custom_call.1} parent=15 // pred_check_branch
          %481 = sbr.rel (%p479) target = $region64
        $region63: #{tpu_custom_call.1} parent=15 // pred_region
          %p482 = scmp.lt.s32.totalorder %s32, 1
          %s483 = scalar_select %p482, %s32, 1
          %s484 = scalar_lea.vmem %s11, %s483
        $region64: #{tpu_custom_call.1} parent=15 // pred_fallthru
          _
      $region16: #{tpu_custom_call.1} parent=5 // pred_fallthru
        _
      %p485 = scmp.le.s32.totalorder 1, %s24
      %p486 = scmp.lt.s32.totalorder %s24, 5
      %p487 = pnand %p485, %p486
      %p488 = pneg %p487
      // Predicated region
      $region65: #{tpu_custom_call.1} parent=5 // pred_check
        _
      $region66: #{tpu_custom_call.1} parent=5 // pred_check_branch
        %490 = sbr.rel (%p487) target = $region68
      $region67: #{tpu_custom_call.1} parent=5 // pred_region
        %s491 = ssub.s32 %s24, 1
        %s492 = sand.u32 %s49, 1
        %s493 = scalar_lea.sflag [#allocation3], %s492
        %s494 = sand.u32 %s49, 1
        %s495 = smul.addr %s494, 8
        %s496 = scalar_lea.vmem [#allocation2], %s495
        // Predicated region
        $region69: #{tpu_custom_call.1} parent=67 // pred_check
          %p497 = pneg %p62
        $region70: #{tpu_custom_call.1} parent=67 // pred_check_branch
          %499 = sbr.rel (%p497) target = $region72
        $region71: #{tpu_custom_call.1} parent=67 // pred_region
          %500 = dma.done %s493, 128
        $region72: #{tpu_custom_call.1} parent=67 // pred_fallthru
          _
        %s501 = sand.u32 %s49, 1
        %s502 = scalar_lea.sflag [#allocation3], %s501
        %s503 = sand.u32 %s49, 1
        %s504 = smul.addr %s503, 8
        %s505 = scalar_lea.vmem [#allocation2], %s504
        %p506 = pneg %p62
        %p507 = pneg %p59
        %p508 = scmp.lt.s32.totalorder %s34, 1
        %s509 = scalar_select %p508, %s34, 1
        %s510 = scalar_lea.vmem %s1, %s509
        %p511 = pneg %p88
        %p512 = pneg %p85
        %p513 = scmp.lt.s32.totalorder %s34, 1
        %s514 = scalar_select %p513, %s34, 1
        %s515 = scalar_lea.vmem %s2, %s514
        %p516 = pneg %p114
        %p517 = pneg %p111
        %p518 = scmp.lt.s32.totalorder %s34, 1
        %s519 = scalar_select %p518, %s34, 1
        %s520 = smul.addr %s519, 4
        %s521 = smul.addr %s520, 8
        %s522 = scalar_lea.vmem %s3, %s521
        %p523 = pneg %p140
        %p524 = pneg %p137
        %p525 = scmp.lt.s32.totalorder %s34, 1
        %s526 = scalar_select %p525, %s34, 1
        %s527 = smul.addr %s526, 4
        %s528 = smul.addr %s527, 8
        %s529 = scalar_lea.vmem %s4, %s528
        %p530 = pneg %p166
        %p531 = pneg %p163
        %p532 = scmp.lt.s32.totalorder %s34, 1
        %s533 = scalar_select %p532, %s34, 1
        %s534 = scalar_lea.vmem %s5, %s533
        %p535 = pneg %p192
        %p536 = pneg %p189
        %p537 = scmp.lt.s32.totalorder %s34, 1
        %s538 = scalar_select %p537, %s34, 1
        %s539 = scalar_lea.vmem %s6, %s538
        %p540 = pneg %p218
        %p541 = pneg %p215
        %p542 = scmp.lt.s32.totalorder %s34, 1
        %s543 = scalar_select %p542, %s34, 1
        %s544 = scalar_lea.vmem %s7, %s543
        %p545 = pneg %p244
        %p546 = pneg %p241
        %p547 = scmp.lt.s32.totalorder %s34, 1
        %s548 = scalar_select %p547, %s34, 1
        %s549 = smul.addr %s548, 4
        %s550 = smul.addr %s549, 8
        %s551 = scalar_lea.vmem %s8, %s550
        %p552 = pneg %p270
        %p553 = pneg %p267
        %p554 = scmp.lt.s32.totalorder %s34, 1
        %s555 = scalar_select %p554, %s34, 1
        %s556 = scalar_lea.vmem %s9, %s555
        %p557 = pneg %p296
        %p558 = pneg %p293
        %p559 = scmp.lt.s32.totalorder %s34, 1
        %s560 = scalar_select %p559, %s34, 1
        %s561 = smul.addr %s560, 8
        %s562 = smul.addr %s561, 8
        %s563 = scalar_lea.vmem %s10, %s562
        %p564 = pneg %p322
        %p565 = pneg %p319
        %p566 = scmp.lt.s32.totalorder %s34, 1
        %s567 = scalar_select %p566, %s34, 1
        %s568 = scalar_lea.vmem %s11, %s567
        %p569 = pneg %p348
        %p570 = pneg %p345
        %p571 = pneg %p374
        %p572 = pneg %p371
        %s573 = sand.u32 %s361, 1
        %s574 = scalar_lea.sflag [#allocation4], %s573
        %s575 = sand.u32 %s361, 1
        %s576 = smul.addr %s575, 8
        %s577 = scalar_lea.vmem [#allocation5], %s576
        %p578 = scmp.lt.s32.totalorder %s34, 1
        %s579 = scalar_select %p578, %s34, 1
        %s580 = scalar_lea.vmem %s1, %s579
        %p581 = scmp.lt.s32.totalorder %s34, 1
        %s582 = scalar_select %p581, %s34, 1
        %s583 = scalar_lea.vmem %s2, %s582
        %p584 = scmp.lt.s32.totalorder %s34, 1
        %s585 = scalar_select %p584, %s34, 1
        %s586 = smul.addr %s585, 4
        %s587 = smul.addr %s586, 8
        %s588 = scalar_lea.vmem %s3, %s587
        %p589 = scmp.lt.s32.totalorder %s34, 1
        %s590 = scalar_select %p589, %s34, 1
        %s591 = smul.addr %s590, 4
        %s592 = smul.addr %s591, 8
        %s593 = scalar_lea.vmem %s4, %s592
        %p594 = scmp.lt.s32.totalorder %s34, 1
        %s595 = scalar_select %p594, %s34, 1
        %s596 = scalar_lea.vmem %s5, %s595
        %p597 = scmp.lt.s32.totalorder %s34, 1
        %s598 = scalar_select %p597, %s34, 1
        %s599 = scalar_lea.vmem %s6, %s598
        %p600 = scmp.lt.s32.totalorder %s34, 1
        %s601 = scalar_select %p600, %s34, 1
        %s602 = scalar_lea.vmem %s7, %s601
        %p603 = scmp.lt.s32.totalorder %s34, 1
        %s604 = scalar_select %p603, %s34, 1
        %s605 = smul.addr %s604, 4
        %s606 = smul.addr %s605, 8
        %s607 = scalar_lea.vmem %s8, %s606
        %p608 = scmp.lt.s32.totalorder %s34, 1
        %s609 = scalar_select %p608, %s34, 1
        %s610 = scalar_lea.vmem %s9, %s609
        %p611 = scmp.lt.s32.totalorder %s34, 1
        %s612 = scalar_select %p611, %s34, 1
        %s613 = smul.addr %s612, 8
        %s614 = smul.addr %s613, 8
        %s615 = scalar_lea.vmem %s10, %s614
        %p616 = scmp.lt.s32.totalorder %s34, 1
        %s617 = scalar_select %p616, %s34, 1
        %s618 = scalar_lea.vmem %s11, %s617
        %p619 = scmp.eq.s32.totalorder %s34, 0
        // Predicated region
        $region73: #{tpu_custom_call.1} parent=67 // pred_check
          %p620 = pneg %p619
        $region74: #{tpu_custom_call.1} parent=67 // pred_check_branch
          %622 = sbr.rel (%p620) target = $region76
        $region75: #{tpu_custom_call.1} parent=67 // pred_region
          %v623 = vld [vmem:[%s496] sm:$0xff]
          %vm624 = vcmask 261120
          %625 = vst.msk [vmem:[%s577] sm:$0xff] %vm624, %v623
        $region76: #{tpu_custom_call.1} parent=67 // pred_fallthru
          _
        %v626 = vld [vmem:[%s577] sm:$0xff]
        %v627 = vld [vmem:[%s580] sm:$0x1]
        %v628 = vld [vmem:[%s583] sm:$0x1]
        %vm629 = vcmask 261120
        %v630 = vsel %vm629, %v626, 0.0
        %631 = vadd.xlane.f32.xlu0 %v630
        %v632 = vpop.xlane.xlu0 %631
        %v633 = vrcp.pop 32.0
        %v634 = vmul.f32 %v632, %v633
        %v635 = vsub.f32 %v626, %v634
        %v636 = vmul.f32 %v635, %v635
        %v637 = vsel %vm629, %v636, 0.0
        %638 = vadd.xlane.f32.xlu0 %v637
        %v639 = vpop.xlane.xlu0 %638
        %v640 = vmul.f32 %v639, %v633
        %v641 = vadd.f32 %v640, 1e-05
        %v642 = vrsqrt.pop %v641
        %v643 = vmul.f32 %v635, %v642
        %v645 = vlaneseq
        %v646 = vshrl.u32 %v645, 7
        %v647 = vsub.s32 0, %v646
        %v648 = vrot.slane %v627, %v647
        %v650 = vmul.f32 %v643, %v648
        %v652 = vlaneseq
        %v653 = vshrl.u32 %v652, 7
        %v654 = vsub.s32 0, %v653
        %v655 = vrot.slane %v628, %v654
        %v657 = vadd.f32 %v650, %v655
        %v658 = vld [vmem:[%s588] sm:$0xff]
        %v659 = vld [vmem:[%s588 + $0x8] sm:$0xff]
        %v660 = vld [vmem:[%s588 + $0x10] sm:$0xff]
        %v661 = vld [vmem:[%s588 + $0x18] sm:$0xff]
        %v663 = vsel %vm629, %v657, 0
        %665 = vmatprep.subr.mxu0 0.0
        %666 = vmatpush1.msra.mxu0 %v658
        %667 = vmatprep.subr.mxu0 0.0
        %668 = vmatpush1.msra.mxu0 %v659
        %669 = vmatprep.subr.mxu0 0.0
        %670 = vmatpush1.msra.mxu0 %v660
        %671 = vmatprep.subr.mxu0 0.0
        %672 = vmatpush1.msra.mxu0 %v661
        %673 = vmatprep.subr.mxu0 0.0
        %674 = vmatpush1.msra.mxu0 0.0
        %675 = vmatprep.subr.mxu0 0.0
        %676 = vmatpush1.msra.mxu0 0.0
        %677 = vmatprep.subr.mxu0 0.0
        %678 = vmatpush1.msra.mxu0 0.0
        %679 = vmatprep.subr.mxu0 0.0
        %680 = vmatpush1.msra.mxu0 0.0
        %681 = vmatprep.subr.mxu0 0.0
        %682 = vmatpush1.msra.mxu0 0.0
        %683 = vmatprep.subr.mxu0 0.0
        %684 = vmatpush1.msra.mxu0 0.0
        %685 = vmatprep.subr.mxu0 0.0
        %686 = vmatpush1.msra.mxu0 0.0
        %687 = vmatprep.subr.mxu0 0.0
        %688 = vmatpush1.msra.mxu0 0.0
        %689 = vmatprep.subr.mxu0 0.0
        %690 = vmatpush1.msra.mxu0 0.0
        %691 = vmatprep.subr.mxu0 0.0
        %692 = vmatpush1.msra.mxu0 0.0
        %693 = vmatprep.subr.mxu0 0.0
        %694 = vmatpush1.msra.mxu0 0.0
        %695 = vmatprep.subr.mxu0 0.0
        %696 = vmatpush1.msra.mxu0 0.0
        %697 = vmatprep.subr.mxu0 0.0
        %698 = vmatpush1.msra.mxu0 0.0
        %699 = vmatprep.subr.mxu0 0.0
        %700 = vmatpush1.msra.mxu0 0.0
        %701 = vmatprep.subr.mxu0 0.0
        %702 = vmatpush1.msra.mxu0 0.0
        %703 = vmatprep.subr.mxu0 0.0
        %704 = vmatpush1.msra.mxu0 0.0
        %705 = vmatprep.subr.mxu0 0.0
        %706 = vmatpush1.msra.mxu0 0.0
        %707 = vmatprep.subr.mxu0 0.0
        %708 = vmatpush1.msra.mxu0 0.0
        %709 = vmatprep.subr.mxu0 0.0
        %710 = vmatpush1.msra.mxu0 0.0
        %711 = vmatprep.subr.mxu0 0.0
        %712 = vmatpush1.msra.mxu0 0.0
        %713 = vmatprep.subr.mxu0 0.0
        %714 = vmatpush1.msra.mxu0 0.0
        %715 = vmatprep.subr.mxu0 0.0
        %716 = vmatpush1.msra.mxu0 0.0
        %717 = vmatprep.subr.mxu0 0.0
        %718 = vmatpush1.msra.mxu0 0.0
        %719 = vmatprep.subr.mxu0 0.0
        %720 = vmatpush1.msra.mxu0 0.0
        %721 = vmatprep.subr.mxu0 0.0
        %722 = vmatpush1.msra.mxu0 0.0
        %723 = vmatprep.subr.mxu0 0.0
        %724 = vmatpush1.msra.mxu0 0.0
        %725 = vmatprep.subr.mxu0 0.0
        %726 = vmatpush1.msra.mxu0 0.0
        %727 = vmatprep.subr.mxu0 0.0
        %728 = vmatpush1.msra.mxu0 0.0
        %729 = vmatprep.mubr.f32.mxu0 0.0
        %730 = vmatmul.mubr.f32.gmra.mrb[0].mxu0 %v663
        %v731 = vpop.f32.mrb[0].mxu0
        %v732 = vadd.f32 0.0, %v731
        %v733 = vpop.f32.mrb[0].mxu0
        %734 = vdwg.mxu0
        %736 = vrot.lane.b32.xlu0 %v732, 96
        %v737 = vpop.permute.xlu0 %736
        %vm738 = vcmask 64512
        %v739 = vsel %vm738, %v732, 0
        %v741 = vsel %vm738, %v737, 0
        %743 = vmatprep.subr.mxu0 0.0
        %744 = vmatpush1.xpose.msra.mxu0 %v741
        %745 = vmatprep.subr.mxu0 0.0
        %746 = vmatpush1.xpose.msra.mxu0 0.0
        %747 = vmatprep.subr.mxu0 0.0
        %748 = vmatpush1.xpose.msra.mxu0 0.0
        %749 = vmatprep.subr.mxu0 0.0
        %750 = vmatpush1.xpose.msra.mxu0 0.0
        %751 = vmatprep.subr.mxu0 0.0
        %752 = vmatpush1.xpose.msra.mxu0 0.0
        %753 = vmatprep.subr.mxu0 0.0
        %754 = vmatpush1.xpose.msra.mxu0 0.0
        %755 = vmatprep.subr.mxu0 0.0
        %756 = vmatpush1.xpose.msra.mxu0 0.0
        %757 = vmatprep.subr.mxu0 0.0
        %758 = vmatpush1.xpose.msra.mxu0 0.0
        %759 = vmatprep.subr.mxu0 0.0
        %760 = vmatpush1.xpose.msra.mxu0 0.0
        %761 = vmatprep.subr.mxu0 0.0
        %762 = vmatpush1.xpose.msra.mxu0 0.0
        %763 = vmatprep.subr.mxu0 0.0
        %764 = vmatpush1.xpose.msra.mxu0 0.0
        %765 = vmatprep.subr.mxu0 0.0
        %766 = vmatpush1.xpose.msra.mxu0 0.0
        %767 = vmatprep.subr.mxu0 0.0
        %768 = vmatpush1.xpose.msra.mxu0 0.0
        %769 = vmatprep.subr.mxu0 0.0
        %770 = vmatpush1.xpose.msra.mxu0 0.0
        %771 = vmatprep.subr.mxu0 0.0
        %772 = vmatpush1.xpose.msra.mxu0 0.0
        %773 = vmatprep.subr.mxu0 0.0
        %774 = vmatpush1.xpose.msra.mxu0 0.0
        %775 = vmatprep.subr.mxu0 0.0
        %776 = vmatpush1.xpose.msra.mxu0 0.0
        %777 = vmatprep.subr.mxu0 0.0
        %778 = vmatpush1.xpose.msra.mxu0 0.0
        %779 = vmatprep.subr.mxu0 0.0
        %780 = vmatpush1.xpose.msra.mxu0 0.0
        %781 = vmatprep.subr.mxu0 0.0
        %782 = vmatpush1.xpose.msra.mxu0 0.0
        %783 = vmatprep.subr.mxu0 0.0
        %784 = vmatpush1.xpose.msra.mxu0 0.0
        %785 = vmatprep.subr.mxu0 0.0
        %786 = vmatpush1.xpose.msra.mxu0 0.0
        %787 = vmatprep.subr.mxu0 0.0
        %788 = vmatpush1.xpose.msra.mxu0 0.0
        %789 = vmatprep.subr.mxu0 0.0
        %790 = vmatpush1.xpose.msra.mxu0 0.0
        %791 = vmatprep.subr.mxu0 0.0
        %792 = vmatpush1.xpose.msra.mxu0 0.0
        %793 = vmatprep.subr.mxu0 0.0
        %794 = vmatpush1.xpose.msra.mxu0 0.0
        %795 = vmatprep.subr.mxu0 0.0
        %796 = vmatpush1.xpose.msra.mxu0 0.0
        %797 = vmatprep.subr.mxu0 0.0
        %798 = vmatpush1.xpose.msra.mxu0 0.0
        %799 = vmatprep.subr.mxu0 0.0
        %800 = vmatpush1.xpose.msra.mxu0 0.0
        %801 = vmatprep.subr.mxu0 0.0
        %802 = vmatpush1.xpose.msra.mxu0 0.0
        %803 = vmatprep.subr.mxu0 0.0
        %804 = vmatpush1.xpose.msra.mxu0 0.0
        %805 = vmatprep.subr.mxu0 0.0
        %806 = vmatpush1.xpose.msra.mxu0 0.0
        %807 = vmatprep.mubr.f32.mxu0 0.0
        %808 = vmatmul.mubr.f32.gmra.mrb[0].mxu0 %v739
        %v809 = vpop.f32.mrb[0].mxu0
        %v810 = vadd.f32 0.0, %v809
        %v811 = vpop.f32.mrb[0].mxu0
        %812 = vdwg.mxu0
        %v813 = vmul.f32 %v810, 0.35355338
        %v814 = vsel %vm738, %v813, -inf
        %815 = vmax.xlane.f32.xlu0 %v814
        %v816 = vpop.xlane.xlu0 %815
        %v817 = vsub.f32 %v813, %v816
        %v818 = vmul.f32 %v817, 1.442695
        %v819 = vpow.pop %v818
        %v820 = vsel %vm738, %v819, 0.0
        %821 = vadd.xlane.f32.xlu0 %v820
        %v822 = vpop.xlane.xlu0 %821
        %v823 = vrcp.pop %v822
        %v824 = vmul.f32 %v819, %v823
        %825 = vrot.lane.b32.xlu0 %v732, 64
        %v826 = vpop.permute.xlu0 %825
        %v829 = vsel %vm738, %v824, 0
        %831 = vmatprep.subr.mxu0 0.0
        %832 = vmatpush1.msra.mxu0 %v826
        %833 = vmatprep.subr.mxu0 0.0
        %834 = vmatpush1.msra.mxu0 0.0
        %835 = vmatprep.subr.mxu0 0.0
        %836 = vmatpush1.msra.mxu0 0.0
        %837 = vmatprep.subr.mxu0 0.0
        %838 = vmatpush1.msra.mxu0 0.0
        %839 = vmatprep.subr.mxu0 0.0
        %840 = vmatpush1.msra.mxu0 0.0
        %841 = vmatprep.subr.mxu0 0.0
        %842 = vmatpush1.msra.mxu0 0.0
        %843 = vmatprep.subr.mxu0 0.0
        %844 = vmatpush1.msra.mxu0 0.0
        %845 = vmatprep.subr.mxu0 0.0
        %846 = vmatpush1.msra.mxu0 0.0
        %847 = vmatprep.subr.mxu0 0.0
        %848 = vmatpush1.msra.mxu0 0.0
        %849 = vmatprep.subr.mxu0 0.0
        %850 = vmatpush1.msra.mxu0 0.0
        %851 = vmatprep.subr.mxu0 0.0
        %852 = vmatpush1.msra.mxu0 0.0
        %853 = vmatprep.subr.mxu0 0.0
        %854 = vmatpush1.msra.mxu0 0.0
        %855 = vmatprep.subr.mxu0 0.0
        %856 = vmatpush1.msra.mxu0 0.0
        %857 = vmatprep.subr.mxu0 0.0
        %858 = vmatpush1.msra.mxu0 0.0
        %859 = vmatprep.subr.mxu0 0.0
        %860 = vmatpush1.msra.mxu0 0.0
        %861 = vmatprep.subr.mxu0 0.0
        %862 = vmatpush1.msra.mxu0 0.0
        %863 = vmatprep.subr.mxu0 0.0
        %864 = vmatpush1.msra.mxu0 0.0
        %865 = vmatprep.subr.mxu0 0.0
        %866 = vmatpush1.msra.mxu0 0.0
        %867 = vmatprep.subr.mxu0 0.0
        %868 = vmatpush1.msra.mxu0 0.0
        %869 = vmatprep.subr.mxu0 0.0
        %870 = vmatpush1.msra.mxu0 0.0
        %871 = vmatprep.subr.mxu0 0.0
        %872 = vmatpush1.msra.mxu0 0.0
        %873 = vmatprep.subr.mxu0 0.0
        %874 = vmatpush1.msra.mxu0 0.0
        %875 = vmatprep.subr.mxu0 0.0
        %876 = vmatpush1.msra.mxu0 0.0
        %877 = vmatprep.subr.mxu0 0.0
        %878 = vmatpush1.msra.mxu0 0.0
        %879 = vmatprep.subr.mxu0 0.0
        %880 = vmatpush1.msra.mxu0 0.0
        %881 = vmatprep.subr.mxu0 0.0
        %882 = vmatpush1.msra.mxu0 0.0
        %883 = vmatprep.subr.mxu0 0.0
        %884 = vmatpush1.msra.mxu0 0.0
        %885 = vmatprep.subr.mxu0 0.0
        %886 = vmatpush1.msra.mxu0 0.0
        %887 = vmatprep.subr.mxu0 0.0
        %888 = vmatpush1.msra.mxu0 0.0
        %889 = vmatprep.subr.mxu0 0.0
        %890 = vmatpush1.msra.mxu0 0.0
        %891 = vmatprep.subr.mxu0 0.0
        %892 = vmatpush1.msra.mxu0 0.0
        %893 = vmatprep.subr.mxu0 0.0
        %894 = vmatpush1.msra.mxu0 0.0
        %895 = vmatprep.mubr.f32.mxu0 0.0
        %896 = vmatmul.mubr.f32.gmra.mrb[0].mxu0 %v829
        %v897 = vpop.f32.mrb[0].mxu0
        %v898 = vadd.f32 0.0, %v897
        %v899 = vpop.f32.mrb[0].mxu0
        %900 = vdwg.mxu0
        %901 = vrot.lane.b32.xlu0 %v732, 120
        %v902 = vpop.permute.xlu0 %901
        %903 = vrot.lane.b32.xlu0 %v732, 88
        %v904 = vpop.permute.xlu0 %903
        %v905 = vsel %vm738, %v902, 0
        %v907 = vsel %vm738, %v904, 0
        %909 = vmatprep.subr.mxu0 0.0
        %910 = vmatpush1.xpose.msra.mxu0 %v907
        %911 = vmatprep.subr.mxu0 0.0
        %912 = vmatpush1.xpose.msra.mxu0 0.0
        %913 = vmatprep.subr.mxu0 0.0
        %914 = vmatpush1.xpose.msra.mxu0 0.0
        %915 = vmatprep.subr.mxu0 0.0
        %916 = vmatpush1.xpose.msra.mxu0 0.0
        %917 = vmatprep.subr.mxu0 0.0
        %918 = vmatpush1.xpose.msra.mxu0 0.0
        %919 = vmatprep.subr.mxu0 0.0
        %920 = vmatpush1.xpose.msra.mxu0 0.0
        %921 = vmatprep.subr.mxu0 0.0
        %922 = vmatpush1.xpose.msra.mxu0 0.0
        %923 = vmatprep.subr.mxu0 0.0
        %924 = vmatpush1.xpose.msra.mxu0 0.0
        %925 = vmatprep.subr.mxu0 0.0
        %926 = vmatpush1.xpose.msra.mxu0 0.0
        %927 = vmatprep.subr.mxu0 0.0
        %928 = vmatpush1.xpose.msra.mxu0 0.0
        %929 = vmatprep.subr.mxu0 0.0
        %930 = vmatpush1.xpose.msra.mxu0 0.0
        %931 = vmatprep.subr.mxu0 0.0
        %932 = vmatpush1.xpose.msra.mxu0 0.0
        %933 = vmatprep.subr.mxu0 0.0
        %934 = vmatpush1.xpose.msra.mxu0 0.0
        %935 = vmatprep.subr.mxu0 0.0
        %936 = vmatpush1.xpose.msra.mxu0 0.0
        %937 = vmatprep.subr.mxu0 0.0
        %938 = vmatpush1.xpose.msra.mxu0 0.0
        %939 = vmatprep.subr.mxu0 0.0
        %940 = vmatpush1.xpose.msra.mxu0 0.0
        %941 = vmatprep.subr.mxu0 0.0
        %942 = vmatpush1.xpose.msra.mxu0 0.0
        %943 = vmatprep.subr.mxu0 0.0
        %944 = vmatpush1.xpose.msra.mxu0 0.0
        %945 = vmatprep.subr.mxu0 0.0
        %946 = vmatpush1.xpose.msra.mxu0 0.0
        %947 = vmatprep.subr.mxu0 0.0
        %948 = vmatpush1.xpose.msra.mxu0 0.0
        %949 = vmatprep.subr.mxu0 0.0
        %950 = vmatpush1.xpose.msra.mxu0 0.0
        %951 = vmatprep.subr.mxu0 0.0
        %952 = vmatpush1.xpose.msra.mxu0 0.0
        %953 = vmatprep.subr.mxu0 0.0
        %954 = vmatpush1.xpose.msra.mxu0 0.0
        %955 = vmatprep.subr.mxu0 0.0
        %956 = vmatpush1.xpose.msra.mxu0 0.0
        %957 = vmatprep.subr.mxu0 0.0
        %958 = vmatpush1.xpose.msra.mxu0 0.0
        %959 = vmatprep.subr.mxu0 0.0
        %960 = vmatpush1.xpose.msra.mxu0 0.0
        %961 = vmatprep.subr.mxu0 0.0
        %962 = vmatpush1.xpose.msra.mxu0 0.0
        %963 = vmatprep.subr.mxu0 0.0
        %964 = vmatpush1.xpose.msra.mxu0 0.0
        %965 = vmatprep.subr.mxu0 0.0
        %966 = vmatpush1.xpose.msra.mxu0 0.0
        %967 = vmatprep.subr.mxu0 0.0
        %968 = vmatpush1.xpose.msra.mxu0 0.0
        %969 = vmatprep.subr.mxu0 0.0
        %970 = vmatpush1.xpose.msra.mxu0 0.0
        %971 = vmatprep.subr.mxu0 0.0
        %972 = vmatpush1.xpose.msra.mxu0 0.0
        %973 = vmatprep.mubr.f32.mxu0 0.0
        %974 = vmatmul.mubr.f32.gmra.mrb[0].mxu0 %v905
        %v975 = vpop.f32.mrb[0].mxu0
        %v976 = vadd.f32 0.0, %v975
        %v977 = vpop.f32.mrb[0].mxu0
        %978 = vdwg.mxu0
        %v979 = vmul.f32 %v976, 0.35355338
        %v980 = vsel %vm738, %v979, -inf
        %981 = vmax.xlane.f32.xlu0 %v980
        %v982 = vpop.xlane.xlu0 %981
        %v983 = vsub.f32 %v979, %v982
        %v984 = vmul.f32 %v983, 1.442695
        %v985 = vpow.pop %v984
        %v986 = vsel %vm738, %v985, 0.0
        %987 = vadd.xlane.f32.xlu0 %v986
        %v988 = vpop.xlane.xlu0 %987
        %v989 = vrcp.pop %v988
        %v990 = vmul.f32 %v985, %v989
        %991 = vrot.lane.b32.xlu0 %v732, 56
        %v992 = vpop.permute.xlu0 %991
        %v995 = vsel %vm738, %v990, 0
        %997 = vmatprep.subr.mxu0 0.0
        %998 = vmatpush1.msra.mxu0 %v992
        %999 = vmatprep.subr.mxu0 0.0
        %1000 = vmatpush1.msra.mxu0 0.0
        %1001 = vmatprep.subr.mxu0 0.0
        %1002 = vmatpush1.msra.mxu0 0.0
        %1003 = vmatprep.subr.mxu0 0.0
        %1004 = vmatpush1.msra.mxu0 0.0
        %1005 = vmatprep.subr.mxu0 0.0
        %1006 = vmatpush1.msra.mxu0 0.0
        %1007 = vmatprep.subr.mxu0 0.0
        %1008 = vmatpush1.msra.mxu0 0.0
        %1009 = vmatprep.subr.mxu0 0.0
        %1010 = vmatpush1.msra.mxu0 0.0
        %1011 = vmatprep.subr.mxu0 0.0
        %1012 = vmatpush1.msra.mxu0 0.0
        %1013 = vmatprep.subr.mxu0 0.0
        %1014 = vmatpush1.msra.mxu0 0.0
        %1015 = vmatprep.subr.mxu0 0.0
        %1016 = vmatpush1.msra.mxu0 0.0
        %1017 = vmatprep.subr.mxu0 0.0
        %1018 = vmatpush1.msra.mxu0 0.0
        %1019 = vmatprep.subr.mxu0 0.0
        %1020 = vmatpush1.msra.mxu0 0.0
        %1021 = vmatprep.subr.mxu0 0.0
        %1022 = vmatpush1.msra.mxu0 0.0
        %1023 = vmatprep.subr.mxu0 0.0
        %1024 = vmatpush1.msra.mxu0 0.0
        %1025 = vmatprep.subr.mxu0 0.0
        %1026 = vmatpush1.msra.mxu0 0.0
        %1027 = vmatprep.subr.mxu0 0.0
        %1028 = vmatpush1.msra.mxu0 0.0
        %1029 = vmatprep.subr.mxu0 0.0
        %1030 = vmatpush1.msra.mxu0 0.0
        %1031 = vmatprep.subr.mxu0 0.0
        %1032 = vmatpush1.msra.mxu0 0.0
        %1033 = vmatprep.subr.mxu0 0.0
        %1034 = vmatpush1.msra.mxu0 0.0
        %1035 = vmatprep.subr.mxu0 0.0
        %1036 = vmatpush1.msra.mxu0 0.0
        %1037 = vmatprep.subr.mxu0 0.0
        %1038 = vmatpush1.msra.mxu0 0.0
        %1039 = vmatprep.subr.mxu0 0.0
        %1040 = vmatpush1.msra.mxu0 0.0
        %1041 = vmatprep.subr.mxu0 0.0
        %1042 = vmatpush1.msra.mxu0 0.0
        %1043 = vmatprep.subr.mxu0 0.0
        %1044 = vmatpush1.msra.mxu0 0.0
        %1045 = vmatprep.subr.mxu0 0.0
        %1046 = vmatpush1.msra.mxu0 0.0
        %1047 = vmatprep.subr.mxu0 0.0
        %1048 = vmatpush1.msra.mxu0 0.0
        %1049 = vmatprep.subr.mxu0 0.0
        %1050 = vmatpush1.msra.mxu0 0.0
        %1051 = vmatprep.subr.mxu0 0.0
        %1052 = vmatpush1.msra.mxu0 0.0
        %1053 = vmatprep.subr.mxu0 0.0
        %1054 = vmatpush1.msra.mxu0 0.0
        %1055 = vmatprep.subr.mxu0 0.0
        %1056 = vmatpush1.msra.mxu0 0.0
        %1057 = vmatprep.subr.mxu0 0.0
        %1058 = vmatpush1.msra.mxu0 0.0
        %1059 = vmatprep.subr.mxu0 0.0
        %1060 = vmatpush1.msra.mxu0 0.0
        %1061 = vmatprep.mubr.f32.mxu0 0.0
        %1062 = vmatmul.mubr.f32.gmra.mrb[0].mxu0 %v995
        %v1063 = vpop.f32.mrb[0].mxu0
        %v1064 = vadd.f32 0.0, %v1063
        %v1065 = vpop.f32.mrb[0].mxu0
        %1066 = vdwg.mxu0
        %1067 = vrot.lane.b32.xlu0 %v732, 112
        %v1068 = vpop.permute.xlu0 %1067
        %1069 = vrot.lane.b32.xlu0 %v732, 80
        %v1070 = vpop.permute.xlu0 %1069
        %v1071 = vsel %vm738, %v1068, 0
        %v1073 = vsel %vm738, %v1070, 0
        %1075 = vmatprep.subr.mxu0 0.0
        %1076 = vmatpush1.xpose.msra.mxu0 %v1073
        %1077 = vmatprep.subr.mxu0 0.0
        %1078 = vmatpush1.xpose.msra.mxu0 0.0
        %1079 = vmatprep.subr.mxu0 0.0
        %1080 = vmatpush1.xpose.msra.mxu0 0.0
        %1081 = vmatprep.subr.mxu0 0.0
        %1082 = vmatpush1.xpose.msra.mxu0 0.0
        %1083 = vmatprep.subr.mxu0 0.0
        %1084 = vmatpush1.xpose.msra.mxu0 0.0
        %1085 = vmatprep.subr.mxu0 0.0
        %1086 = vmatpush1.xpose.msra.mxu0 0.0
        %1087 = vmatprep.subr.mxu0 0.0
        %1088 = vmatpush1.xpose.msra.mxu0 0.0
        %1089 = vmatprep.subr.mxu0 0.0
        %1090 = vmatpush1.xpose.msra.mxu0 0.0
        %1091 = vmatprep.subr.mxu0 0.0
        %1092 = vmatpush1.xpose.msra.mxu0 0.0
        %1093 = vmatprep.subr.mxu0 0.0
        %1094 = vmatpush1.xpose.msra.mxu0 0.0
        %1095 = vmatprep.subr.mxu0 0.0
        %1096 = vmatpush1.xpose.msra.mxu0 0.0
        %1097 = vmatprep.subr.mxu0 0.0
        %1098 = vmatpush1.xpose.msra.mxu0 0.0
        %1099 = vmatprep.subr.mxu0 0.0
        %1100 = vmatpush1.xpose.msra.mxu0 0.0
        %1101 = vmatprep.subr.mxu0 0.0
        %1102 = vmatpush1.xpose.msra.mxu0 0.0
        %1103 = vmatprep.subr.mxu0 0.0
        %1104 = vmatpush1.xpose.msra.mxu0 0.0
        %1105 = vmatprep.subr.mxu0 0.0
        %1106 = vmatpush1.xpose.msra.mxu0 0.0
        %1107 = vmatprep.subr.mxu0 0.0
        %1108 = vmatpush1.xpose.msra.mxu0 0.0
        %1109 = vmatprep.subr.mxu0 0.0
        %1110 = vmatpush1.xpose.msra.mxu0 0.0
        %1111 = vmatprep.subr.mxu0 0.0
        %1112 = vmatpush1.xpose.msra.mxu0 0.0
        %1113 = vmatprep.subr.mxu0 0.0
        %1114 = vmatpush1.xpose.msra.mxu0 0.0
        %1115 = vmatprep.subr.mxu0 0.0
        %1116 = vmatpush1.xpose.msra.mxu0 0.0
        %1117 = vmatprep.subr.mxu0 0.0
        %1118 = vmatpush1.xpose.msra.mxu0 0.0
        %1119 = vmatprep.subr.mxu0 0.0
        %1120 = vmatpush1.xpose.msra.mxu0 0.0
        %1121 = vmatprep.subr.mxu0 0.0
        %1122 = vmatpush1.xpose.msra.mxu0 0.0
        %1123 = vmatprep.subr.mxu0 0.0
        %1124 = vmatpush1.xpose.msra.mxu0 0.0
        %1125 = vmatprep.subr.mxu0 0.0
        %1126 = vmatpush1.xpose.msra.mxu0 0.0
        %1127 = vmatprep.subr.mxu0 0.0
        %1128 = vmatpush1.xpose.msra.mxu0 0.0
        %1129 = vmatprep.subr.mxu0 0.0
        %1130 = vmatpush1.xpose.msra.mxu0 0.0
        %1131 = vmatprep.subr.mxu0 0.0
        %1132 = vmatpush1.xpose.msra.mxu0 0.0
        %1133 = vmatprep.subr.mxu0 0.0
        %1134 = vmatpush1.xpose.msra.mxu0 0.0
        %1135 = vmatprep.subr.mxu0 0.0
        %1136 = vmatpush1.xpose.msra.mxu0 0.0
        %1137 = vmatprep.subr.mxu0 0.0
        %1138 = vmatpush1.xpose.msra.mxu0 0.0
        %1139 = vmatprep.mubr.f32.mxu0 0.0
        %1140 = vmatmul.mubr.f32.gmra.mrb[0].mxu0 %v1071
        %v1141 = vpop.f32.mrb[0].mxu0
        %v1142 = vadd.f32 0.0, %v1141
        %v1143 = vpop.f32.mrb[0].mxu0
        %1144 = vdwg.mxu0
        %v1145 = vmul.f32 %v1142, 0.35355338
        %v1146 = vsel %vm738, %v1145, -inf
        %1147 = vmax.xlane.f32.xlu0 %v1146
        %v1148 = vpop.xlane.xlu0 %1147
        %v1149 = vsub.f32 %v1145, %v1148
        %v1150 = vmul.f32 %v1149, 1.442695
        %v1151 = vpow.pop %v1150
        %v1152 = vsel %vm738, %v1151, 0.0
        %1153 = vadd.xlane.f32.xlu0 %v1152
        %v1154 = vpop.xlane.xlu0 %1153
        %v1155 = vrcp.pop %v1154
        %v1156 = vmul.f32 %v1151, %v1155
        %1157 = vrot.lane.b32.xlu0 %v732, 48
        %v1158 = vpop.permute.xlu0 %1157
        %v1161 = vsel %vm738, %v1156, 0
        %1163 = vmatprep.subr.mxu0 0.0
        %1164 = vmatpush1.msra.mxu0 %v1158
        %1165 = vmatprep.subr.mxu0 0.0
        %1166 = vmatpush1.msra.mxu0 0.0
        %1167 = vmatprep.subr.mxu0 0.0
        %1168 = vmatpush1.msra.mxu0 0.0
        %1169 = vmatprep.subr.mxu0 0.0
        %1170 = vmatpush1.msra.mxu0 0.0
        %1171 = vmatprep.subr.mxu0 0.0
        %1172 = vmatpush1.msra.mxu0 0.0
        %1173 = vmatprep.subr.mxu0 0.0
        %1174 = vmatpush1.msra.mxu0 0.0
        %1175 = vmatprep.subr.mxu0 0.0
        %1176 = vmatpush1.msra.mxu0 0.0
        %1177 = vmatprep.subr.mxu0 0.0
        %1178 = vmatpush1.msra.mxu0 0.0
        %1179 = vmatprep.subr.mxu0 0.0
        %1180 = vmatpush1.msra.mxu0 0.0
        %1181 = vmatprep.subr.mxu0 0.0
        %1182 = vmatpush1.msra.mxu0 0.0
        %1183 = vmatprep.subr.mxu0 0.0
        %1184 = vmatpush1.msra.mxu0 0.0
        %1185 = vmatprep.subr.mxu0 0.0
        %1186 = vmatpush1.msra.mxu0 0.0
        %1187 = vmatprep.subr.mxu0 0.0
        %1188 = vmatpush1.msra.mxu0 0.0
        %1189 = vmatprep.subr.mxu0 0.0
        %1190 = vmatpush1.msra.mxu0 0.0
        %1191 = vmatprep.subr.mxu0 0.0
        %1192 = vmatpush1.msra.mxu0 0.0
        %1193 = vmatprep.subr.mxu0 0.0
        %1194 = vmatpush1.msra.mxu0 0.0
        %1195 = vmatprep.subr.mxu0 0.0
        %1196 = vmatpush1.msra.mxu0 0.0
        %1197 = vmatprep.subr.mxu0 0.0
        %1198 = vmatpush1.msra.mxu0 0.0
        %1199 = vmatprep.subr.mxu0 0.0
        %1200 = vmatpush1.msra.mxu0 0.0
        %1201 = vmatprep.subr.mxu0 0.0
        %1202 = vmatpush1.msra.mxu0 0.0
        %1203 = vmatprep.subr.mxu0 0.0
        %1204 = vmatpush1.msra.mxu0 0.0
        %1205 = vmatprep.subr.mxu0 0.0
        %1206 = vmatpush1.msra.mxu0 0.0
        %1207 = vmatprep.subr.mxu0 0.0
        %1208 = vmatpush1.msra.mxu0 0.0
        %1209 = vmatprep.subr.mxu0 0.0
        %1210 = vmatpush1.msra.mxu0 0.0
        %1211 = vmatprep.subr.mxu0 0.0
        %1212 = vmatpush1.msra.mxu0 0.0
        %1213 = vmatprep.subr.mxu0 0.0
        %1214 = vmatpush1.msra.mxu0 0.0
        %1215 = vmatprep.subr.mxu0 0.0
        %1216 = vmatpush1.msra.mxu0 0.0
        %1217 = vmatprep.subr.mxu0 0.0
        %1218 = vmatpush1.msra.mxu0 0.0
        %1219 = vmatprep.subr.mxu0 0.0
        %1220 = vmatpush1.msra.mxu0 0.0
        %1221 = vmatprep.subr.mxu0 0.0
        %1222 = vmatpush1.msra.mxu0 0.0
        %1223 = vmatprep.subr.mxu0 0.0
        %1224 = vmatpush1.msra.mxu0 0.0
        %1225 = vmatprep.subr.mxu0 0.0
        %1226 = vmatpush1.msra.mxu0 0.0
        %1227 = vmatprep.mubr.f32.mxu0 0.0
        %1228 = vmatmul.mubr.f32.gmra.mrb[0].mxu0 %v1161
        %v1229 = vpop.f32.mrb[0].mxu0
        %v1230 = vadd.f32 0.0, %v1229
        %v1231 = vpop.f32.mrb[0].mxu0
        %1232 = vdwg.mxu0
        %1233 = vrot.lane.b32.xlu0 %v732, 104
        %v1234 = vpop.permute.xlu0 %1233
        %1235 = vrot.lane.b32.xlu0 %v732, 72
        %v1236 = vpop.permute.xlu0 %1235
        %v1237 = vsel %vm738, %v1234, 0
        %v1239 = vsel %vm738, %v1236, 0
        %1241 = vmatprep.subr.mxu0 0.0
        %1242 = vmatpush1.xpose.msra.mxu0 %v1239
        %1243 = vmatprep.subr.mxu0 0.0
        %1244 = vmatpush1.xpose.msra.mxu0 0.0
        %1245 = vmatprep.subr.mxu0 0.0
        %1246 = vmatpush1.xpose.msra.mxu0 0.0
        %1247 = vmatprep.subr.mxu0 0.0
        %1248 = vmatpush1.xpose.msra.mxu0 0.0
        %1249 = vmatprep.subr.mxu0 0.0
        %1250 = vmatpush1.xpose.msra.mxu0 0.0
        %1251 = vmatprep.subr.mxu0 0.0
        %1252 = vmatpush1.xpose.msra.mxu0 0.0
        %1253 = vmatprep.subr.mxu0 0.0
        %1254 = vmatpush1.xpose.msra.mxu0 0.0
        %1255 = vmatprep.subr.mxu0 0.0
        %1256 = vmatpush1.xpose.msra.mxu0 0.0
        %1257 = vmatprep.subr.mxu0 0.0
        %1258 = vmatpush1.xpose.msra.mxu0 0.0
        %1259 = vmatprep.subr.mxu0 0.0
        %1260 = vmatpush1.xpose.msra.mxu0 0.0
        %1261 = vmatprep.subr.mxu0 0.0
        %1262 = vmatpush1.xpose.msra.mxu0 0.0
        %1263 = vmatprep.subr.mxu0 0.0
        %1264 = vmatpush1.xpose.msra.mxu0 0.0
        %1265 = vmatprep.subr.mxu0 0.0
        %1266 = vmatpush1.xpose.msra.mxu0 0.0
        %1267 = vmatprep.subr.mxu0 0.0
        %1268 = vmatpush1.xpose.msra.mxu0 0.0
        %1269 = vmatprep.subr.mxu0 0.0
        %1270 = vmatpush1.xpose.msra.mxu0 0.0
        %1271 = vmatprep.subr.mxu0 0.0
        %1272 = vmatpush1.xpose.msra.mxu0 0.0
        %1273 = vmatprep.subr.mxu0 0.0
        %1274 = vmatpush1.xpose.msra.mxu0 0.0
        %1275 = vmatprep.subr.mxu0 0.0
        %1276 = vmatpush1.xpose.msra.mxu0 0.0
        %1277 = vmatprep.subr.mxu0 0.0
        %1278 = vmatpush1.xpose.msra.mxu0 0.0
        %1279 = vmatprep.subr.mxu0 0.0
        %1280 = vmatpush1.xpose.msra.mxu0 0.0
        %1281 = vmatprep.subr.mxu0 0.0
        %1282 = vmatpush1.xpose.msra.mxu0 0.0
        %1283 = vmatprep.subr.mxu0 0.0
        %1284 = vmatpush1.xpose.msra.mxu0 0.0
        %1285 = vmatprep.subr.mxu0 0.0
        %1286 = vmatpush1.xpose.msra.mxu0 0.0
        %1287 = vmatprep.subr.mxu0 0.0
        %1288 = vmatpush1.xpose.msra.mxu0 0.0
        %1289 = vmatprep.subr.mxu0 0.0
        %1290 = vmatpush1.xpose.msra.mxu0 0.0
        %1291 = vmatprep.subr.mxu0 0.0
        %1292 = vmatpush1.xpose.msra.mxu0 0.0
        %1293 = vmatprep.subr.mxu0 0.0
        %1294 = vmatpush1.xpose.msra.mxu0 0.0
        %1295 = vmatprep.subr.mxu0 0.0
        %1296 = vmatpush1.xpose.msra.mxu0 0.0
        %1297 = vmatprep.subr.mxu0 0.0
        %1298 = vmatpush1.xpose.msra.mxu0 0.0
        %1299 = vmatprep.subr.mxu0 0.0
        %1300 = vmatpush1.xpose.msra.mxu0 0.0
        %1301 = vmatprep.subr.mxu0 0.0
        %1302 = vmatpush1.xpose.msra.mxu0 0.0
        %1303 = vmatprep.subr.mxu0 0.0
        %1304 = vmatpush1.xpose.msra.mxu0 0.0
        %1305 = vmatprep.mubr.f32.mxu0 0.0
        %1306 = vmatmul.mubr.f32.gmra.mrb[0].mxu0 %v1237
        %v1307 = vpop.f32.mrb[0].mxu0
        %v1308 = vadd.f32 0.0, %v1307
        %v1309 = vpop.f32.mrb[0].mxu0
        %1310 = vdwg.mxu0
        %v1311 = vmul.f32 %v1308, 0.35355338
        %v1312 = vsel %vm738, %v1311, -inf
        %1313 = vmax.xlane.f32.xlu0 %v1312
        %v1314 = vpop.xlane.xlu0 %1313
        %v1315 = vsub.f32 %v1311, %v1314
        %v1316 = vmul.f32 %v1315, 1.442695
        %v1317 = vpow.pop %v1316
        %v1318 = vsel %vm738, %v1317, 0.0
        %1319 = vadd.xlane.f32.xlu0 %v1318
        %v1320 = vpop.xlane.xlu0 %1319
        %v1321 = vrcp.pop %v1320
        %v1322 = vmul.f32 %v1317, %v1321
        %1323 = vrot.lane.b32.xlu0 %v732, 40
        %v1324 = vpop.permute.xlu0 %1323
        %v1327 = vsel %vm738, %v1322, 0
        %1329 = vmatprep.subr.mxu0 0.0
        %1330 = vmatpush1.msra.mxu0 %v1324
        %1331 = vmatprep.subr.mxu0 0.0
        %1332 = vmatpush1.msra.mxu0 0.0
        %1333 = vmatprep.subr.mxu0 0.0
        %1334 = vmatpush1.msra.mxu0 0.0
        %1335 = vmatprep.subr.mxu0 0.0
        %1336 = vmatpush1.msra.mxu0 0.0
        %1337 = vmatprep.subr.mxu0 0.0
        %1338 = vmatpush1.msra.mxu0 0.0
        %1339 = vmatprep.subr.mxu0 0.0
        %1340 = vmatpush1.msra.mxu0 0.0
        %1341 = vmatprep.subr.mxu0 0.0
        %1342 = vmatpush1.msra.mxu0 0.0
        %1343 = vmatprep.subr.mxu0 0.0
        %1344 = vmatpush1.msra.mxu0 0.0
        %1345 = vmatprep.subr.mxu0 0.0
        %1346 = vmatpush1.msra.mxu0 0.0
        %1347 = vmatprep.subr.mxu0 0.0
        %1348 = vmatpush1.msra.mxu0 0.0
        %1349 = vmatprep.subr.mxu0 0.0
        %1350 = vmatpush1.msra.mxu0 0.0
        %1351 = vmatprep.subr.mxu0 0.0
        %1352 = vmatpush1.msra.mxu0 0.0
        %1353 = vmatprep.subr.mxu0 0.0
        %1354 = vmatpush1.msra.mxu0 0.0
        %1355 = vmatprep.subr.mxu0 0.0
        %1356 = vmatpush1.msra.mxu0 0.0
        %1357 = vmatprep.subr.mxu0 0.0
        %1358 = vmatpush1.msra.mxu0 0.0
        %1359 = vmatprep.subr.mxu0 0.0
        %1360 = vmatpush1.msra.mxu0 0.0
        %1361 = vmatprep.subr.mxu0 0.0
        %1362 = vmatpush1.msra.mxu0 0.0
        %1363 = vmatprep.subr.mxu0 0.0
        %1364 = vmatpush1.msra.mxu0 0.0
        %1365 = vmatprep.subr.mxu0 0.0
        %1366 = vmatpush1.msra.mxu0 0.0
        %1367 = vmatprep.subr.mxu0 0.0
        %1368 = vmatpush1.msra.mxu0 0.0
        %1369 = vmatprep.subr.mxu0 0.0
        %1370 = vmatpush1.msra.mxu0 0.0
        %1371 = vmatprep.subr.mxu0 0.0
        %1372 = vmatpush1.msra.mxu0 0.0
        %1373 = vmatprep.subr.mxu0 0.0
        %1374 = vmatpush1.msra.mxu0 0.0
        %1375 = vmatprep.subr.mxu0 0.0
        %1376 = vmatpush1.msra.mxu0 0.0
        %1377 = vmatprep.subr.mxu0 0.0
        %1378 = vmatpush1.msra.mxu0 0.0
        %1379 = vmatprep.subr.mxu0 0.0
        %1380 = vmatpush1.msra.mxu0 0.0
        %1381 = vmatprep.subr.mxu0 0.0
        %1382 = vmatpush1.msra.mxu0 0.0
        %1383 = vmatprep.subr.mxu0 0.0
        %1384 = vmatpush1.msra.mxu0 0.0
        %1385 = vmatprep.subr.mxu0 0.0
        %1386 = vmatpush1.msra.mxu0 0.0
        %1387 = vmatprep.subr.mxu0 0.0
        %1388 = vmatpush1.msra.mxu0 0.0
        %1389 = vmatprep.subr.mxu0 0.0
        %1390 = vmatpush1.msra.mxu0 0.0
        %1391 = vmatprep.subr.mxu0 0.0
        %1392 = vmatpush1.msra.mxu0 0.0
        %1393 = vmatprep.mubr.f32.mxu0 0.0
        %1394 = vmatmul.mubr.f32.gmra.mrb[0].mxu0 %v1327
        %v1395 = vpop.f32.mrb[0].mxu0
        %v1396 = vadd.f32 0.0, %v1395
        %v1397 = vpop.f32.mrb[0].mxu0
        %1398 = vdwg.mxu0
        %1400 = vrot.lane.b32.xlu0 %v1064, 8
        %v1401 = vpop.permute.xlu0 %1400
        %1404 = vrot.lane.b32.xlu0 %v1230, 16
        %v1405 = vpop.permute.xlu0 %1404
        %1408 = vrot.lane.b32.xlu0 %v1396, 24
        %v1409 = vpop.permute.xlu0 %1408
        %v1411 = vsel %vm738, %v898, %v1401
        %vm1412 = vcmask 130048
        %v1413 = vsel %vm1412, %v1411, %v1405
        %vm1414 = vcmask 195584
        %v1415 = vsel %vm1414, %v1413, %v1409
        %v1416 = vld [vmem:[%s593] sm:$0xff]
        %v1417 = vld [vmem:[%s593 + $0x8] sm:$0xff]
        %v1418 = vld [vmem:[%s593 + $0x10] sm:$0xff]
        %v1419 = vld [vmem:[%s593 + $0x18] sm:$0xff]
        %v1420 = vld [vmem:[%s596] sm:$0x1]
        %v1422 = vlaneseq
        %v1423 = vshrl.u32 %v1422, 7
        %v1424 = vsub.s32 0, %v1423
        %v1425 = vrot.slane %v1420, %v1424
        %v1428 = vsel %vm629, %v1415, 0
        %1430 = vmatprep.subr.mxu0 0.0
        %1431 = vmatpush1.msra.mxu0 %v1416
        %1432 = vmatprep.subr.mxu0 0.0
        %1433 = vmatpush1.msra.mxu0 %v1417
        %1434 = vmatprep.subr.mxu0 0.0
        %1435 = vmatpush1.msra.mxu0 %v1418
        %1436 = vmatprep.subr.mxu0 0.0
        %1437 = vmatpush1.msra.mxu0 %v1419
        %1438 = vmatprep.subr.mxu0 0.0
        %1439 = vmatpush1.msra.mxu0 0.0
        %1440 = vmatprep.subr.mxu0 0.0
        %1441 = vmatpush1.msra.mxu0 0.0
        %1442 = vmatprep.subr.mxu0 0.0
        %1443 = vmatpush1.msra.mxu0 0.0
        %1444 = vmatprep.subr.mxu0 0.0
        %1445 = vmatpush1.msra.mxu0 0.0
        %1446 = vmatprep.subr.mxu0 0.0
        %1447 = vmatpush1.msra.mxu0 0.0
        %1448 = vmatprep.subr.mxu0 0.0
        %1449 = vmatpush1.msra.mxu0 0.0
        %1450 = vmatprep.subr.mxu0 0.0
        %1451 = vmatpush1.msra.mxu0 0.0
        %1452 = vmatprep.subr.mxu0 0.0
        %1453 = vmatpush1.msra.mxu0 0.0
        %1454 = vmatprep.subr.mxu0 0.0
        %1455 = vmatpush1.msra.mxu0 0.0
        %1456 = vmatprep.subr.mxu0 0.0
        %1457 = vmatpush1.msra.mxu0 0.0
        %1458 = vmatprep.subr.mxu0 0.0
        %1459 = vmatpush1.msra.mxu0 0.0
        %1460 = vmatprep.subr.mxu0 0.0
        %1461 = vmatpush1.msra.mxu0 0.0
        %1462 = vmatprep.subr.mxu0 0.0
        %1463 = vmatpush1.msra.mxu0 0.0
        %1464 = vmatprep.subr.mxu0 0.0
        %1465 = vmatpush1.msra.mxu0 0.0
        %1466 = vmatprep.subr.mxu0 0.0
        %1467 = vmatpush1.msra.mxu0 0.0
        %1468 = vmatprep.subr.mxu0 0.0
        %1469 = vmatpush1.msra.mxu0 0.0
        %1470 = vmatprep.subr.mxu0 0.0
        %1471 = vmatpush1.msra.mxu0 0.0
        %1472 = vmatprep.subr.mxu0 0.0
        %1473 = vmatpush1.msra.mxu0 0.0
        %1474 = vmatprep.subr.mxu0 0.0
        %1475 = vmatpush1.msra.mxu0 0.0
        %1476 = vmatprep.subr.mxu0 0.0
        %1477 = vmatpush1.msra.mxu0 0.0
        %1478 = vmatprep.subr.mxu0 0.0
        %1479 = vmatpush1.msra.mxu0 0.0
        %1480 = vmatprep.subr.mxu0 0.0
        %1481 = vmatpush1.msra.mxu0 0.0
        %1482 = vmatprep.subr.mxu0 0.0
        %1483 = vmatpush1.msra.mxu0 0.0
        %1484 = vmatprep.subr.mxu0 0.0
        %1485 = vmatpush1.msra.mxu0 0.0
        %1486 = vmatprep.subr.mxu0 0.0
        %1487 = vmatpush1.msra.mxu0 0.0
        %1488 = vmatprep.subr.mxu0 0.0
        %1489 = vmatpush1.msra.mxu0 0.0
        %1490 = vmatprep.subr.mxu0 0.0
        %1491 = vmatpush1.msra.mxu0 0.0
        %1492 = vmatprep.subr.mxu0 0.0
        %1493 = vmatpush1.msra.mxu0 0.0
        %1494 = vmatprep.mubr.f32.mxu0 0.0
        %1495 = vmatmul.mubr.f32.gmra.mrb[0].mxu0 %v1428
        %v1496 = vpop.f32.mrb[0].mxu0
        %v1497 = vadd.f32 %v1425, %v1496
        %v1498 = vpop.f32.mrb[0].mxu0
        %1499 = vdwg.mxu0
        %v1500 = vadd.f32 %v626, %v1497
        %v1501 = vld [vmem:[%s599] sm:$0x1]
        %v1502 = vld [vmem:[%s602] sm:$0x1]
        %v1503 = vsel %vm629, %v1500, 0.0
        %1504 = vadd.xlane.f32.xlu0 %v1503
        %v1505 = vpop.xlane.xlu0 %1504
        %v1506 = vmul.f32 %v1505, %v633
        %v1507 = vsub.f32 %v1500, %v1506
        %v1508 = vmul.f32 %v1507, %v1507
        %v1509 = vsel %vm629, %v1508, 0.0
        %1510 = vadd.xlane.f32.xlu0 %v1509
        %v1511 = vpop.xlane.xlu0 %1510
        %v1512 = vmul.f32 %v1511, %v633
        %v1513 = vadd.f32 %v1512, 1e-05
        %v1514 = vrsqrt.pop %v1513
        %v1515 = vmul.f32 %v1507, %v1514
        %v1517 = vlaneseq
        %v1518 = vshrl.u32 %v1517, 7
        %v1519 = vsub.s32 0, %v1518
        %v1520 = vrot.slane %v1501, %v1519
        %v1522 = vmul.f32 %v1515, %v1520
        %v1524 = vlaneseq
        %v1525 = vshrl.u32 %v1524, 7
        %v1526 = vsub.s32 0, %v1525
        %v1527 = vrot.slane %v1502, %v1526
        %v1529 = vadd.f32 %v1522, %v1527
        %v1530 = vld [vmem:[%s607] sm:$0xff]
        %v1531 = vld [vmem:[%s607 + $0x8] sm:$0xff]
        %v1532 = vld [vmem:[%s607 + $0x10] sm:$0xff]
        %v1533 = vld [vmem:[%s607 + $0x18] sm:$0xff]
        %v1534 = vld [vmem:[%s610] sm:$0x1]
        %v1536 = vlaneseq
        %v1537 = vshrl.u32 %v1536, 7
        %v1538 = vsub.s32 0, %v1537
        %v1539 = vrot.slane %v1534, %v1538
        %v1542 = vsel %vm629, %v1529, 0
        %1544 = vmatprep.subr.mxu0 0.0
        %1545 = vmatpush1.msra.mxu0 %v1530
        %1546 = vmatprep.subr.mxu0 0.0
        %1547 = vmatpush1.msra.mxu0 %v1531
        %1548 = vmatprep.subr.mxu0 0.0
        %1549 = vmatpush1.msra.mxu0 %v1532
        %1550 = vmatprep.subr.mxu0 0.0
        %1551 = vmatpush1.msra.mxu0 %v1533
        %1552 = vmatprep.subr.mxu0 0.0
        %1553 = vmatpush1.msra.mxu0 0.0
        %1554 = vmatprep.subr.mxu0 0.0
        %1555 = vmatpush1.msra.mxu0 0.0
        %1556 = vmatprep.subr.mxu0 0.0
        %1557 = vmatpush1.msra.mxu0 0.0
        %1558 = vmatprep.subr.mxu0 0.0
        %1559 = vmatpush1.msra.mxu0 0.0
        %1560 = vmatprep.subr.mxu0 0.0
        %1561 = vmatpush1.msra.mxu0 0.0
        %1562 = vmatprep.subr.mxu0 0.0
        %1563 = vmatpush1.msra.mxu0 0.0
        %1564 = vmatprep.subr.mxu0 0.0
        %1565 = vmatpush1.msra.mxu0 0.0
        %1566 = vmatprep.subr.mxu0 0.0
        %1567 = vmatpush1.msra.mxu0 0.0
        %1568 = vmatprep.subr.mxu0 0.0
        %1569 = vmatpush1.msra.mxu0 0.0
        %1570 = vmatprep.subr.mxu0 0.0
        %1571 = vmatpush1.msra.mxu0 0.0
        %1572 = vmatprep.subr.mxu0 0.0
        %1573 = vmatpush1.msra.mxu0 0.0
        %1574 = vmatprep.subr.mxu0 0.0
        %1575 = vmatpush1.msra.mxu0 0.0
        %1576 = vmatprep.subr.mxu0 0.0
        %1577 = vmatpush1.msra.mxu0 0.0
        %1578 = vmatprep.subr.mxu0 0.0
        %1579 = vmatpush1.msra.mxu0 0.0
        %1580 = vmatprep.subr.mxu0 0.0
        %1581 = vmatpush1.msra.mxu0 0.0
        %1582 = vmatprep.subr.mxu0 0.0
        %1583 = vmatpush1.msra.mxu0 0.0
        %1584 = vmatprep.subr.mxu0 0.0
        %1585 = vmatpush1.msra.mxu0 0.0
        %1586 = vmatprep.subr.mxu0 0.0
        %1587 = vmatpush1.msra.mxu0 0.0
        %1588 = vmatprep.subr.mxu0 0.0
        %1589 = vmatpush1.msra.mxu0 0.0
        %1590 = vmatprep.subr.mxu0 0.0
        %1591 = vmatpush1.msra.mxu0 0.0
        %1592 = vmatprep.subr.mxu0 0.0
        %1593 = vmatpush1.msra.mxu0 0.0
        %1594 = vmatprep.subr.mxu0 0.0
        %1595 = vmatpush1.msra.mxu0 0.0
        %1596 = vmatprep.subr.mxu0 0.0
        %1597 = vmatpush1.msra.mxu0 0.0
        %1598 = vmatprep.subr.mxu0 0.0
        %1599 = vmatpush1.msra.mxu0 0.0
        %1600 = vmatprep.subr.mxu0 0.0
        %1601 = vmatpush1.msra.mxu0 0.0
        %1602 = vmatprep.subr.mxu0 0.0
        %1603 = vmatpush1.msra.mxu0 0.0
        %1604 = vmatprep.subr.mxu0 0.0
        %1605 = vmatpush1.msra.mxu0 0.0
        %1606 = vmatprep.subr.mxu0 0.0
        %1607 = vmatpush1.msra.mxu0 0.0
        %1608 = vmatprep.mubr.f32.mxu0 0.0
        %1609 = vmatmul.mubr.f32.gmra.mrb[0].mxu0 %v1542
        %v1610 = vpop.f32.mrb[0].mxu0
        %v1611 = vadd.f32 %v1539, %v1610
        %v1612 = vpop.f32.mrb[0].mxu0
        %1613 = vdwg.mxu0
        %v1614 = vmul.f32 %v1611, 0.5
        %v1615 = vmul.f32 %v1611, 0.70710677
        %v1616 = verf.f32.pop %v1615
        %v1617 = vadd.f32 %v1616, 1.0
        %v1618 = vmul.f32 %v1614, %v1617
        %v1619 = vld [vmem:[%s615] sm:$0xff]
        %v1620 = vld [vmem:[%s615 + $0x8] sm:$0xff]
        %v1621 = vld [vmem:[%s615 + $0x10] sm:$0xff]
        %v1622 = vld [vmem:[%s615 + $0x18] sm:$0xff]
        %v1623 = vld [vmem:[%s615 + $0x20] sm:$0xff]
        %v1624 = vld [vmem:[%s615 + $0x28] sm:$0xff]
        %v1625 = vld [vmem:[%s615 + $0x30] sm:$0xff]
        %v1626 = vld [vmem:[%s615 + $0x38] sm:$0xff]
        %v1627 = vld [vmem:[%s618] sm:$0x1]
        %v1629 = vlaneseq
        %v1630 = vshrl.u32 %v1629, 7
        %v1631 = vsub.s32 0, %v1630
        %v1632 = vrot.slane %v1627, %v1631
        %vm1634 = vcmask 523264
        %v1636 = vsel %vm1634, %v1618, 0
        %1638 = vmatprep.subr.mxu0 0.0
        %1639 = vmatpush1.msra.mxu0 %v1619
        %1640 = vmatprep.subr.mxu0 0.0
        %1641 = vmatpush1.msra.mxu0 %v1620
        %1642 = vmatprep.subr.mxu0 0.0
        %1643 = vmatpush1.msra.mxu0 %v1621
        %1644 = vmatprep.subr.mxu0 0.0
        %1645 = vmatpush1.msra.mxu0 %v1622
        %1646 = vmatprep.subr.mxu0 0.0
        %1647 = vmatpush1.msra.mxu0 %v1623
        %1648 = vmatprep.subr.mxu0 0.0
        %1649 = vmatpush1.msra.mxu0 %v1624
        %1650 = vmatprep.subr.mxu0 0.0
        %1651 = vmatpush1.msra.mxu0 %v1625
        %1652 = vmatprep.subr.mxu0 0.0
        %1653 = vmatpush1.msra.mxu0 %v1626
        %1654 = vmatprep.subr.mxu0 0.0
        %1655 = vmatpush1.msra.mxu0 0.0
        %1656 = vmatprep.subr.mxu0 0.0
        %1657 = vmatpush1.msra.mxu0 0.0
        %1658 = vmatprep.subr.mxu0 0.0
        %1659 = vmatpush1.msra.mxu0 0.0
        %1660 = vmatprep.subr.mxu0 0.0
        %1661 = vmatpush1.msra.mxu0 0.0
        %1662 = vmatprep.subr.mxu0 0.0
        %1663 = vmatpush1.msra.mxu0 0.0
        %1664 = vmatprep.subr.mxu0 0.0
        %1665 = vmatpush1.msra.mxu0 0.0
        %1666 = vmatprep.subr.mxu0 0.0
        %1667 = vmatpush1.msra.mxu0 0.0
        %1668 = vmatprep.subr.mxu0 0.0
        %1669 = vmatpush1.msra.mxu0 0.0
        %1670 = vmatprep.subr.mxu0 0.0
        %1671 = vmatpush1.msra.mxu0 0.0
        %1672 = vmatprep.subr.mxu0 0.0
        %1673 = vmatpush1.msra.mxu0 0.0
        %1674 = vmatprep.subr.mxu0 0.0
        %1675 = vmatpush1.msra.mxu0 0.0
        %1676 = vmatprep.subr.mxu0 0.0
        %1677 = vmatpush1.msra.mxu0 0.0
        %1678 = vmatprep.subr.mxu0 0.0
        %1679 = vmatpush1.msra.mxu0 0.0
        %1680 = vmatprep.subr.mxu0 0.0
        %1681 = vmatpush1.msra.mxu0 0.0
        %1682 = vmatprep.subr.mxu0 0.0
        %1683 = vmatpush1.msra.mxu0 0.0
        %1684 = vmatprep.subr.mxu0 0.0
        %1685 = vmatpush1.msra.mxu0 0.0
        %1686 = vmatprep.subr.mxu0 0.0
        %1687 = vmatpush1.msra.mxu0 0.0
        %1688 = vmatprep.subr.mxu0 0.0
        %1689 = vmatpush1.msra.mxu0 0.0
        %1690 = vmatprep.subr.mxu0 0.0
        %1691 = vmatpush1.msra.mxu0 0.0
        %1692 = vmatprep.subr.mxu0 0.0
        %1693 = vmatpush1.msra.mxu0 0.0
        %1694 = vmatprep.subr.mxu0 0.0
        %1695 = vmatpush1.msra.mxu0 0.0
        %1696 = vmatprep.subr.mxu0 0.0
        %1697 = vmatpush1.msra.mxu0 0.0
        %1698 = vmatprep.subr.mxu0 0.0
        %1699 = vmatpush1.msra.mxu0 0.0
        %1700 = vmatprep.subr.mxu0 0.0
        %1701 = vmatpush1.msra.mxu0 0.0
        %1702 = vmatprep.mubr.f32.mxu0 0.0
        %1703 = vmatmul.mubr.f32.gmra.mrb[0].mxu0 %v1636
        %v1704 = vpop.f32.mrb[0].mxu0
        %v1705 = vadd.f32 %v1632, %v1704
        %v1706 = vpop.f32.mrb[0].mxu0
        %1707 = vdwg.mxu0
        %v1708 = vadd.f32 %v1500, %v1705
        %1709 = vst.msk [vmem:[%s577] sm:$0xff] %vm629, %v1708
        %s1710 = sand.u32 %s361, 1
        %s1711 = scalar_lea.sflag [#allocation4], %s1710
        %s1712 = sand.u32 %s361, 1
        %s1713 = smul.addr %s1712, 8
        %s1714 = scalar_lea.vmem [#allocation5], %s1713
        // Predicated region
        $region77: #{tpu_custom_call.1} parent=67 // pred_check
          %p1715 = pneg %p371
        $region78: #{tpu_custom_call.1} parent=67 // pred_check_branch
          %1717 = sbr.rel (%p1715) target = $region80
        $region79: #{tpu_custom_call.1} parent=67 // pred_region
          %s1719 = ssub.s32 128, 128
          %1720 = vsyncadd %s1711, %s1719
          %s1721 = smul.addr %s33, 128
          %s1722 = scalar_lea.hbm %s12, %s1721
          %s1724 = sshll.u32 %s1714, 4
          %s1725 = int_to_ptr.vmem [resolvable:$true] %s1724
          %1727 = dma.vmem_to_hbm [thread:$0]  %s1725, 128, %s1722, %s1711
        $region80: #{tpu_custom_call.1} parent=67 // pred_fallthru
          _
      $region68: #{tpu_custom_call.1} parent=5 // pred_fallthru
        _
      %p1728 = scmp.le.s32.totalorder 2, %s24
      // Predicated region
      $region81: #{tpu_custom_call.1} parent=5 // pred_check
        %p1729 = pneg %p1728
      $region82: #{tpu_custom_call.1} parent=5 // pred_check_branch
        %1731 = sbr.rel (%p1729) target = $region84
      $region83: #{tpu_custom_call.1} parent=5 // pred_region
        %s1732 = ssub.s32 %s24, 2
        // Predicated region
        $region85: #{tpu_custom_call.1} parent=83 // pred_check
          %p1733 = pneg %p377
        $region86: #{tpu_custom_call.1} parent=83 // pred_check_branch
          %1735 = sbr.rel (%p1733) target = $region88
        $region87: #{tpu_custom_call.1} parent=83 // pred_region
          %s1736 = sand.u32 %s362, 1
          %s1737 = scalar_lea.sflag [#allocation4], %s1736
          %s1738 = sand.u32 %s362, 1
          %s1739 = smul.addr %s1738, 8
          %s1740 = scalar_lea.vmem [#allocation5], %s1739
          %1741 = dma.done %s1737, 128
        $region88: #{tpu_custom_call.1} parent=83 // pred_fallthru
          _
      $region84: #{tpu_custom_call.1} parent=5 // pred_fallthru
        _
    $region6: #{tpu_custom_call.1} parent=1 // loop_footer
      %s28 = sadd.s32 1, %s24
    $region7: #{tpu_custom_call.1} parent=1 // loop_footer_branch
      %23 = sbr.rel target = $region3
    $region8: #{tpu_custom_call.1} parent=1 // loop_exit
      _
    %1742 = vsyncpa [#allocation3], 1
    %s1743 = scalar_lea.sflag [#allocation3], 1
    %1744 = vsyncpa %s1743, 1
    %1745 = vsyncpa [#allocation4], 1
    %s1746 = scalar_lea.sflag [#allocation4], 1
    %1747 = vsyncpa %s1746, 1

</llo_original>
